<compile_context>
chip_gen: v7x
topology: tpu7x:2x2x1
jax: 0.10.0
libtpu: 0.0.40
codegen_flags: <defaults>
</compile_context>

<pallas_src>
import jax
import jax.numpy as jnp
import numpy as np
from jax import lax
from jax.experimental import pallas as pl
from jax.experimental.pallas import tpu as pltpu


# ----------------------------------------------------------------------------
# Pallas kernels
# ----------------------------------------------------------------------------
def _stem_matmul_kernel(x_ref, w_ref, s_ref, b_ref, o_ref):
    # conv0 (as im2col matmul) with fused BN+ReLU epilogue.
    y = jnp.dot(x_ref[...], w_ref[...], preferred_element_type=jnp.float32)
    o_ref[...] = jnp.maximum(y * s_ref[...] + b_ref[...], 0.0).astype(o_ref.dtype)


def _make_dense_layer_kernel(taps):
    """Fused dense layer: BN+ReLU -> 1x1 conv -> BN+ReLU -> 1x3x3 conv (tap sum).

    `taps` is a static list of (tap_index, needs_mask, lane_shift); taps whose
    receptive field falls entirely in the zero padding are dropped statically.
    Layout: x (C_end, S) channels-first, S = H*W on the lane axis.
    """
    def kernel(x_ref, s1_ref, b1_ref, w1_ref, s2_ref, b2_ref, w2_ref, m_ref, o_ref):
        x = x_ref[0].astype(jnp.float32)                            # (C_end, S)
        z1 = jnp.maximum(x * s1_ref[...] + b1_ref[...], 0.0).astype(jnp.bfloat16)
        h = jnp.dot(w1_ref[...], z1, preferred_element_type=jnp.float32)  # (Cbn, S)
        z2 = jnp.maximum(h * s2_ref[...] + b2_ref[...], 0.0).astype(jnp.bfloat16)
        s = z2.shape[1]
        acc = None
        for t, needs_mask, shift in taps:
            r = (-shift) % s
            zt = z2 if r == 0 else pltpu.roll(z2, shift=r, axis=1)
            if needs_mask:
                zt = zt * m_ref[t]                                  # (1, S) 0/1 mask
            part = jnp.dot(w2_ref[t], zt, preferred_element_type=jnp.float32)
            acc = part if acc is None else acc + part
        o_ref[0] = acc.astype(o_ref.dtype)                          # (g, S) new feats
    return kernel


def _make_transition_kernel(tpool):
    """Fused transition: BN+ReLU, temporal mean over tpool frames, 1x1 conv,
    spatial 2x2 average via pooling-matrix matmul."""
    inv = 1.0 / float(tpool)

    def kernel(x_ref, s_ref, b_ref, w_ref, p_ref, o_ref):
        acc = jnp.maximum(x_ref[0].astype(jnp.float32) * s_ref[...] + b_ref[...], 0.0)
        for t in range(1, tpool):
            acc = acc + jnp.maximum(
                x_ref[t].astype(jnp.float32) * s_ref[...] + b_ref[...], 0.0)
        z = (acc * inv).astype(jnp.bfloat16)                        # (C, S)
        h = jnp.dot(w_ref[...], z, preferred_element_type=jnp.float32)   # (C/2, S)
        o_ref[0] = jnp.dot(h.astype(jnp.bfloat16), p_ref[...],
                           preferred_element_type=jnp.float32).astype(o_ref.dtype)
    return kernel


def _make_head_kernel(inv_total):
    """BN+ReLU -> chunked global-average-pool accumulation -> Linear."""
    def kernel(x_ref, s_ref, b_ref, w_ref, cb_ref, o_ref, acc_ref):
        si = pl.program_id(1)

        @pl.when(si == 0)
        def _init():
            acc_ref[...] = jnp.zeros_like(acc_ref)

        z = jnp.maximum(x_ref[0].astype(jnp.float32) * s_ref[...] + b_ref[...], 0.0)
        acc_ref[...] += jnp.sum(z, axis=0, keepdims=True)

        @pl.when(si == pl.num_programs(1) - 1)
        def _finalize():
            pooled = acc_ref[...] * inv_total                       # (1, C)
            o_ref[0] = (jnp.dot(pooled, w_ref[...],
                                preferred_element_type=jnp.float32)
                        + cb_ref[...]).astype(o_ref.dtype)
    return kernel


# ----------------------------------------------------------------------------
# Static helpers (tap plans, masks, pooling matrices)
# ----------------------------------------------------------------------------
def _tap_plan(height, width):
    """Static plan for the 1x3x3 conv taps in the (C, H*W) layout."""
    s = height * width
    taps = []
    mask = np.zeros((9, 1, s), np.float32)
    for j in range(3):
        for k in range(3):
            dy, dx = j - 1, k - 1
            t = j * 3 + k
            valid = np.zeros((height, width), np.float32)
            h0, h1 = max(0, -dy), height - max(0, dy)
            w0, w1 = max(0, -dx), width - max(0, dx)
            if h0 < h1 and w0 < w1:
                valid[h0:h1, w0:w1] = 1.0
            mask[t, 0, :] = valid.reshape(-1)
            if valid.any():
                taps.append((t, not bool(valid.all()), dy * width + dx))
    return taps, mask


def _pool_matrix(height, width, h_out, w_out):
    """Right-multiply matrix implementing 2x2/stride-2 spatial average pooling."""
    pmat = np.zeros((height * width, h_out * w_out), np.float32)
    for h in range(2 * h_out):
        for w in range(2 * w_out):
            pmat[h * width + w, (h // 2) * w_out + (w // 2)] = 0.25
    return pmat


def _stem_row_tile(m):
    for t in (512, 256, 128, 64, 32, 16, 8):
        if m % t == 0:
            return t
    return m


# ----------------------------------------------------------------------------
# Pallas wrappers
# ----------------------------------------------------------------------------
def pallas_conv0_bn_relu(cols, wmat, scale, bias):
    """cols (M, K) bf16 @ wmat (K, C0) bf16, fused BN+ReLU epilogue -> (M, C0)."""
    m, k = cols.shape
    c0 = wmat.shape[1]
    tm = _stem_row_tile(m)
    return pl.pallas_call(
        _stem_matmul_kernel,
        out_shape=jax.ShapeDtypeStruct((m, c0), jnp.bfloat16),
        grid=(m // tm,),
        in_specs=[
            pl.BlockSpec((tm, k), lambda i: (i, 0)),
            pl.BlockSpec((k, c0), lambda i: (0, 0)),
            pl.BlockSpec((1, c0), lambda i: (0, 0)),
            pl.BlockSpec((1, c0), lambda i: (0, 0)),
        ],
        out_specs=pl.BlockSpec((tm, c0), lambda i: (i, 0)),
        compiler_params=pltpu.CompilerParams(dimension_semantics=("parallel",)),
    )(cols, wmat, scale, bias)


def pallas_dense_layer(slab, lp, taps, masks):
    """One fused dense layer; writes its growth_rate new channels in place."""
    bsz, c_end, s = slab.shape
    g, cbn = lp["conv2_w"].shape[1], lp["conv2_w"].shape[2]
    assert lp["c_in"] % g == 0 and c_end % g == 0
    coff_blk = lp["c_in"] // g
    kernel = _make_dense_layer_kernel(taps)
    return pl.pallas_call(
        kernel,
        out_shape=jax.ShapeDtypeStruct((bsz, c_end, s), slab.dtype),
        grid=(bsz,),
        in_specs=[
            pl.BlockSpec((1, c_end, s), lambda b: (b, 0, 0)),
            pl.BlockSpec((c_end, 1), lambda b: (0, 0)),
            pl.BlockSpec((c_end, 1), lambda b: (0, 0)),
            pl.BlockSpec((cbn, c_end), lambda b: (0, 0)),
            pl.BlockSpec((cbn, 1), lambda b: (0, 0)),
            pl.BlockSpec((cbn, 1), lambda b: (0, 0)),
            pl.BlockSpec((9, g, cbn), lambda b: (0, 0, 0)),
            pl.BlockSpec((9, 1, s), lambda b: (0, 0, 0)),
        ],
        out_specs=pl.BlockSpec((1, g, s), lambda b, _o=coff_blk: (b, _o, 0)),
        input_output_aliases={0: 0},
        compiler_params=pltpu.CompilerParams(dimension_semantics=("parallel",)),
    )(slab, lp["n1_s"], lp["n1_b"], lp["conv1_w"], lp["n2_s"], lp["n2_b"],
      lp["conv2_w"], masks)


def pallas_transition(slab, tp, tpool, pmat, b_out, c_out, s_out):
    b_in, c, s = slab.shape
    kernel = _make_transition_kernel(tpool)
    return pl.pallas_call(
        kernel,
        out_shape=jax.ShapeDtypeStruct((b_out, c_out, s_out), slab.dtype),
        grid=(b_out,),
        in_specs=[
            pl.BlockSpec((tpool, c, s), lambda b: (b, 0, 0)),
            pl.BlockSpec((c, 1), lambda b: (0, 0)),
            pl.BlockSpec((c, 1), lambda b: (0, 0)),
            pl.BlockSpec((c_out, c), lambda b: (0, 0)),
            pl.BlockSpec((s, s_out), lambda b: (0, 0)),
        ],
        out_specs=pl.BlockSpec((1, c_out, s_out), lambda b: (b, 0, 0)),
        compiler_params=pltpu.CompilerParams(dimension_semantics=("parallel",)),
    )(slab, tp["n_s"], tp["n_b"], tp["conv_w"], pmat)


def pallas_head(x, scale, bias, w, b):
    """relu(bn(x)) -> mean over S (chunked accumulation) -> linear.  x:(N,S,C)."""
    n, s_tot, c = x.shape
    k = w.shape[1]
    chunk = s_tot
    for t in (1024, 512, 256, 128, 64, 32, 16, 8):
        if s_tot % t == 0:
            chunk = t
            break
    n_chunks = s_tot // chunk
    kernel = _make_head_kernel(1.0 / float(s_tot))
    out = pl.pallas_call(
        kernel,
        out_shape=jax.ShapeDtypeStruct((n, 1, k), jnp.float32),
        grid=(n, n_chunks),
        in_specs=[
            pl.BlockSpec((1, chunk, c), lambda i, si: (i, si, 0)),
            pl.BlockSpec((1, c), lambda i, si: (0, 0)),
            pl.BlockSpec((1, c), lambda i, si: (0, 0)),
            pl.BlockSpec((c, k), lambda i, si: (0, 0)),
            pl.BlockSpec((1, k), lambda i, si: (0, 0)),
        ],
        out_specs=pl.BlockSpec((1, 1, k), lambda i, si: (i, 0, 0)),
        scratch_shapes=[pltpu.VMEM((1, c), jnp.float32)],
        compiler_params=pltpu.CompilerParams(
            dimension_semantics=("parallel", "arbitrary")),
    )(x, scale, bias, w, b)
    return out.reshape(n, k)


# ----------------------------------------------------------------------------
# Parameter init (deterministic; BatchNorm folded to scale/bias, inference mode)
# ----------------------------------------------------------------------------
def _kaiming(key, shape):
    fan_in = shape[1] * shape[2] * shape[3] * shape[4]
    return jax.random.normal(key, shape, jnp.float32) * jnp.sqrt(2.0 / fan_in)


def _make_bn(key, c, eps=1e-5):
    k1, k2, k3, k4 = jax.random.split(key, 4)
    gamma = 1.0 + 0.1 * jax.random.normal(k1, (c,), jnp.float32)
    beta = 0.1 * jax.random.normal(k2, (c,), jnp.float32)
    mean = 0.1 * jax.random.normal(k3, (c,), jnp.float32)
    var = 1.0 + 0.1 * jnp.abs(jax.random.normal(k4, (c,), jnp.float32))
    scale = gamma / jnp.sqrt(var + eps)
    bias = beta - mean * scale
    return scale, bias


def init_params(key, growth_rate=8, block_config=(2, 2, 2, 2),
                num_init_features=16, bn_size=2, num_classes=10):
    keys = iter(jax.random.split(key, 256))
    bf16 = jnp.bfloat16
    p = {}

    w0 = _kaiming(next(keys), (num_init_features, 3, 5, 7, 7))
    p["conv0_wmat"] = jnp.transpose(w0, (2, 3, 4, 1, 0)).reshape(
        5 * 7 * 7 * 3, num_init_features).astype(bf16)
    s0, b0 = _make_bn(next(keys), num_init_features)
    p["norm0_s"], p["norm0_b"] = s0.reshape(1, -1), b0.reshape(1, -1)

    num_features = num_init_features
    downsample_pos = [0]  # default net_version path
    blocks = []
    for i, num_layers in enumerate(block_config):
        c_end = num_features + num_layers * growth_rate
        layers = []
        for l in range(num_layers):
            c_in = num_features + l * growth_rate
            cbn = bn_size * growth_rate
            lp = {"c_in": c_in}
            s1, b1 = _make_bn(next(keys), c_in)
            lp["n1_s"] = jnp.pad(s1, (0, c_end - c_in)).reshape(c_end, 1)
            lp["n1_b"] = jnp.pad(b1, (0, c_end - c_in)).reshape(c_end, 1)
            w1 = _kaiming(next(keys), (cbn, c_in, 1, 1, 1)).reshape(cbn, c_in)
            lp["conv1_w"] = jnp.pad(w1, ((0, 0), (0, c_end - c_in))).astype(bf16)
            s2, b2 = _make_bn(next(keys), cbn)
            lp["n2_s"], lp["n2_b"] = s2.reshape(cbn, 1), b2.reshape(cbn, 1)
            w2 = _kaiming(next(keys), (growth_rate, cbn, 1, 3, 3))
            lp["conv2_w"] = jnp.transpose(w2[:, :, 0, :, :], (2, 3, 0, 1)).reshape(
                9, growth_rate, cbn).astype(bf16)
            layers.append(lp)
        num_features = c_end
        block = {"layers": layers, "c_end": c_end, "trans": None, "tpool": 1}
        if i != len(block_config) - 1:
            tp = {}
            st, bt = _make_bn(next(keys), num_features)
            tp["n_s"], tp["n_b"] = st.reshape(-1, 1), bt.reshape(-1, 1)
            wt = _kaiming(next(keys), (num_features // 2, num_features, 1, 1, 1))
            tp["conv_w"] = wt.reshape(num_features // 2, num_features).astype(bf16)
            block["trans"] = tp
            block["tpool"] = 2 if i in downsample_pos else 1
            num_features //= 2
        blocks.append(block)
    p["blocks"] = blocks

    s5, b5 = _make_bn(next(keys), num_features)
    p["norm5_s"], p["norm5_b"] = s5.reshape(1, -1), b5.reshape(1, -1)
    p["cls_w"] = (jax.random.normal(
        next(keys), (num_classes, num_features), jnp.float32) * 0.05).T  # (C, K)
    p["cls_b"] = jnp.zeros((1, num_classes), jnp.float32)
    return p


# ----------------------------------------------------------------------------
# Forward pass
# ----------------------------------------------------------------------------
def densenet_forward(x_ncdhw, params):
    bf16 = jnp.bfloat16
    x = jnp.transpose(x_ncdhw, (0, 2, 3, 4, 1)).astype(bf16)  # (N, D, H, W, 3)
    n, d, h, w, cin = x.shape

    # ---- stem: conv0 (5,7,7)/s2/p(2,3,3) with fused BN+ReLU ----
    kd, kh, kw = 5, 7, 7
    pd, ph, pw = 2, 3, 3
    do = (d + 2 * pd - kd) // 2 + 1
    ho = (h + 2 * ph - kh) // 2 + 1
    wo = (w + 2 * pw - kw) // 2 + 1
    xp = jnp.pad(x, ((0, 0), (pd, pd), (ph, ph), (pw, pw), (0, 0)))
    # TODO(synk): conv0 still uses an im2col patch matrix (~30x input bytes in
    # bf16); a tap-accumulating stem kernel (like the dense-layer conv) would
    # remove this at production resolutions.
    patches = []
    for i in range(kd):
        for j in range(kh):
            for k in range(kw):
                patches.append(
                    xp[:, i:i + 2 * do:2, j:j + 2 * ho:2, k:k + 2 * wo:2, :])
    cols = jnp.stack(patches, axis=4).reshape(n * do * ho * wo, kd * kh * kw * cin)
    c0 = params["conv0_wmat"].shape[1]
    stem = pallas_conv0_bn_relu(cols, params["conv0_wmat"],
                                params["norm0_s"], params["norm0_b"])
    stem = stem.reshape(n, do, ho, wo, c0)

    # ---- maxpool k3 s2 p1 ----
    # TODO(synk): max pooling stays as lax.reduce_window glue (one pass; not the
    # hot path).
    stem = lax.reduce_window(
        stem, jnp.array(-jnp.inf, stem.dtype), lax.max,
        window_dimensions=(1, 3, 3, 3, 1), window_strides=(1, 2, 2, 2, 1),
        padding=((0, 0), (1, 1), (1, 1), (1, 1), (0, 0)))
    n, d, h, w, c = stem.shape

    # channels-first per-frame slab: (N*D, C, H*W)
    slab = jnp.transpose(stem, (0, 1, 4, 2, 3)).reshape(n * d, c, h * w)

    # ---- dense blocks / transitions ----
    for block in params["blocks"]:
        c_end = block["c_end"]
        slab = jnp.pad(slab, ((0, 0), (0, c_end - c), (0, 0)))
        taps, mask_np = _tap_plan(h, w)
        masks = jnp.asarray(mask_np).astype(bf16)
        for lp in block["layers"]:
            slab = pallas_dense_layer(slab, lp, taps, masks)
        c = c_end
        if block["trans"] is not None:
            tpool = block["tpool"]
            d_out = d // tpool
            if d_out * tpool != d:  # AvgPool3d floor: drop trailing frames
                slab = slab.reshape(n, d, c, h * w)[:, :d_out * tpool].reshape(
                    n * d_out * tpool, c, h * w)
            h_out, w_out = h // 2, w // 2
            pmat = jnp.asarray(_pool_matrix(h, w, h_out, w_out)).astype(bf16)
            slab = pallas_transition(slab, block["trans"], tpool, pmat,
                                     n * d_out, c // 2, h_out * w_out)
            c //= 2
            d, h, w = d_out, h_out, w_out

    # ---- head: norm5 -> relu -> global avg pool -> (dropout p=0) -> linear ----
    s_tot = d * h * w
    feats = slab.reshape(n, d, c, h * w).transpose(0, 1, 3, 2).reshape(n, s_tot, c)
    logits = pallas_head(feats, params["norm5_s"], params["norm5_b"],
                         params["cls_w"], params["cls_b"])
    return logits


# ----------------------------------------------------------------------------
if __name__ == "__main__":
    key = jax.random.PRNGKey(0)
    pkey, xkey = jax.random.split(key)

    num_classes = 10
    params = init_params(
        pkey, growth_rate=8, block_config=(2, 2, 2, 2),
        num_init_features=16, bn_size=2, num_classes=num_classes)

    # PyTorch-style NCDHW input: (batch=2, channels=3, depth=8, H=32, W=32)
    x = jax.random.normal(xkey, (2, 3, 8, 32, 32), jnp.float32)

    out = densenet_forward(x, params)
    out = jax.block_until_ready(out)
    assert out.shape == (2, num_classes)
    assert bool(jnp.all(jnp.isfinite(out)))
    print("KERNEL_OK")
</pallas_src>

<mosaic_0001>
module attributes {stable_mosaic.version = 11 : i64} {
  func.func @_stem_matmul_kernel(%arg0: i32, %arg1: memref<512x735xbf16, #tpu.memory_space<vmem>>, %arg2: memref<735x16xbf16, #tpu.memory_space<vmem>>, %arg3: memref<1x16xf32, #tpu.memory_space<vmem>>, %arg4: memref<1x16xf32, #tpu.memory_space<vmem>>, %arg5: memref<512x16xbf16, #tpu.memory_space<vmem>>) attributes {dimension_semantics = [#tpu.dimension_semantics<parallel>], iteration_bounds = array<i64: 4>, scalar_prefetch = 0 : i64, scratch_operands = 0 : i64, tpu.core_type = #tpu.core_type<tc>, window_params = [{transform_indices = @transform_0, window_bounds = array<i64: 512, 735>}, {pipeline_mode = #tpu.pipeline_mode<synchronous>, transform_indices = @transform_1, window_bounds = array<i64: 735, 16>}, {pipeline_mode = #tpu.pipeline_mode<synchronous>, transform_indices = @transform_2, window_bounds = array<i64: 1, 16>}, {pipeline_mode = #tpu.pipeline_mode<synchronous>, transform_indices = @transform_3, window_bounds = array<i64: 1, 16>}, {transform_indices = @transform_4, window_bounds = array<i64: 512, 16>}]} {
    %c0 = arith.constant 0 : index
    %c0_0 = arith.constant 0 : index
    %0 = vector.load %arg1[%c0, %c0_0] : memref<512x735xbf16, #tpu.memory_space<vmem>>, vector<512x735xbf16>
    %c0_1 = arith.constant 0 : index
    %c0_2 = arith.constant 0 : index
    %1 = vector.load %arg2[%c0_1, %c0_2] : memref<735x16xbf16, #tpu.memory_space<vmem>>, vector<735x16xbf16>
    %cst = arith.constant dense<0.000000e+00> : vector<512x16xf32>
    %2 = tpu.matmul %0, %1, %cst {dimension_numbers = #tpu.dot_dimension_numbers<[1], [0], [0], [1], [0, 0, 1, 1], [], []>} : vector<512x735xbf16>, vector<735x16xbf16>, vector<512x16xf32> -> vector<512x16xf32>
    %c0_3 = arith.constant 0 : index
    %c0_4 = arith.constant 0 : index
    %3 = vector.load %arg3[%c0_3, %c0_4] : memref<1x16xf32, #tpu.memory_space<vmem>>, vector<1x16xf32>
    %4 = vector.broadcast %3 : vector<1x16xf32> to vector<512x16xf32>
    %5 = arith.mulf %2, %4 : vector<512x16xf32>
    %c0_5 = arith.constant 0 : index
    %c0_6 = arith.constant 0 : index
    %6 = vector.load %arg4[%c0_5, %c0_6] : memref<1x16xf32, #tpu.memory_space<vmem>>, vector<1x16xf32>
    %7 = vector.broadcast %6 : vector<1x16xf32> to vector<512x16xf32>
    %8 = arith.addf %5, %7 : vector<512x16xf32>
    %cst_7 = arith.constant 0.000000e+00 : f32
    %9 = vector.broadcast %cst_7 : f32 to vector<512x16xf32>
    %10 = arith.maximumf %8, %9 : vector<512x16xf32>
    %11 = arith.truncf %10 : vector<512x16xf32> to vector<512x16xbf16>
    %c0_8 = arith.constant 0 : index
    %c0_9 = arith.constant 0 : index
    %12 = vector.load %arg5[%c0_8, %c0_9] : memref<512x16xbf16, #tpu.memory_space<vmem>>, vector<512x16xbf16>
    tpu.vector_store %arg5[%c0_8, %c0_9], %11 {strides = array<i32>} : memref<512x16xbf16, #tpu.memory_space<vmem>>, vector<512x16xbf16>,
    return
  }
  func.func @transform_0(%arg0: i32) -> (i32, i32) {
    %c0_i32 = arith.constant 0 : i32
    %c0_i32_0 = arith.constant 0 : i32
    return %arg0, %c0_i32 : i32, i32
  }
  func.func @transform_1(%arg0: i32) -> (i32, i32) {
    %c0_i32 = arith.constant 0 : i32
    %c0_i32_0 = arith.constant 0 : i32
    %c0_i32_1 = arith.constant 0 : i32
    return %c0_i32, %c0_i32_0 : i32, i32
  }
  func.func @transform_2(%arg0: i32) -> (i32, i32) {
    %c0_i32 = arith.constant 0 : i32
    %c0_i32_0 = arith.constant 0 : i32
    %c0_i32_1 = arith.constant 0 : i32
    return %c0_i32, %c0_i32_0 : i32, i32
  }
  func.func @transform_3(%arg0: i32) -> (i32, i32) {
    %c0_i32 = arith.constant 0 : i32
    %c0_i32_0 = arith.constant 0 : i32
    %c0_i32_1 = arith.constant 0 : i32
    return %c0_i32, %c0_i32_0 : i32, i32
  }
  func.func @transform_4(%arg0: i32) -> (i32, i32) {
    %c0_i32 = arith.constant 0 : i32
    %c0_i32_0 = arith.constant 0 : i32
    return %arg0, %c0_i32 : i32, i32
  }
}

</mosaic_0001>

<llo_original>
// kernel: tpu_custom_call.1
$region0: #{tpu_custom_call.1}
  #allocation0 [shape = 'u32[]', space=smem, size = 0x4, offset = 0x4, fixed_abs, tag = 'smem constant byte address 0x4 - core index']
  #allocation1 [shape = 'u32[144,128]{1,0:T(1,128)}', space=vmem, size = 0x12000, scoped, tag = 'internal scratch']
  %s0 = inlined_call_operand.vmem [shape: bf16[2048,735], index: 0, kind: input, shape index: {}]
  %s1 = inlined_call_operand.vmem [shape: bf16[735,16], index: 1, kind: input, shape index: {}]
  %s2 = inlined_call_operand.vmem [shape: f32[1,16], index: 2, kind: input, shape index: {}]
  %s3 = inlined_call_operand.vmem [shape: f32[1,16], index: 3, kind: input, shape index: {}]
  %s4 = inlined_call_operand.vmem [shape: bf16[2048,16], index: 4, kind: output, shape index: {}]
  %s5 = sld [smem:[#allocation0]]
  $region49: #{tpu_custom_call.1} parent=0
    _
  %s7 = ssub.s32 1, %s5
  %s8 = scalar_select 0, %s7, %s5
  loop: start=0, step=1, limit=6
  $region2: #{tpu_custom_call.1} parent=0 // loop_pre_header
    _
  $region3: #{tpu_custom_call.1} parent=0 // loop_header
    %s10 = sphi 0, %s14
    %p11 = scmp.ge.s32.totalorder %s10, 6
    %s20 = sphi 0, %s22
    %s23 = sphi 0, %s20
    %s24 = sphi 0, %s23
    %s40 = sphi 0, %s24
    %s44 = sphi 0, %s44
    %s46 = sphi 0, %s44
    %s47 = sphi 0, %s46
    %s61 = sphi 0, %s47
    %s65 = sphi 0, %s65
    %s67 = sphi 0, %s65
    %s68 = sphi 0, %s67
    %s82 = sphi 0, %s68
    %s86 = sphi 0, %s86
    %s88 = sphi 0, %s86
    %s89 = sphi 0, %s88
    %s103 = sphi 0, %s89
    %s109 = sphi 0, %s111
    %s112 = sphi 0, %s109
    %s113 = sphi 0, %s112
    %s129 = sphi 0, %s113
  $region4: #{tpu_custom_call.1} parent=0 // loop_header_branch
    %13 = sbr.rel (%p11) target = $region8
  $region5: #{tpu_custom_call.1} parent=0 // loop_body
    %s15 = ssub.s32 %s10, 1
    %s16 = ssub.s32 %s10, 2
    %s17 = sadd.s32 %s10, 1
    %s18 = ssub.s32 %s10, %s17
    %p19 = scmp.eq.s32.totalorder %s18, 0
    %s21 = sadd.s32 %s20, 1
    %s22 = scalar_select %p19, %s20, %s21
    %p25 = pneg %p19
    %p26 = scmp.eq.s32.totalorder %s10, 3
    %p27 = por %p25, %p26
    %p28 = scmp.ne.s32.totalorder %s20, %s23
    %p29 = scmp.eq.s32.totalorder %s10, 0
    %p30 = por %p28, %p29
    %p31 = scmp.ne.s32.totalorder %s20, %s23
    %p32 = scmp.eq.s32.totalorder %s15, 3
    %p33 = por %p31, %p32
    %p34 = scmp.ne.s32.totalorder %s23, %s24
    %p35 = scmp.eq.s32.totalorder %s15, 0
    %p36 = por %p34, %p35
    %p37 = scmp.ne.s32.totalorder %s23, %s24
    %p38 = scmp.eq.s32.totalorder %s16, 3
    %p39 = por %p37, %p38
    %p41 = scmp.ne.s32.totalorder %s24, %s40
    %p42 = scmp.eq.s32.totalorder %s16, 0
    %p43 = por %p41, %p42
    %s45 = sadd.s32 %s44, 1
    %p48 = scmp.eq.s32.totalorder %s10, 3
    %p49 = scmp.ne.s32.totalorder %s44, %s46
    %p50 = scmp.eq.s32.totalorder %s10, 0
    %p51 = por %p49, %p50
    %p52 = scmp.ne.s32.totalorder %s44, %s46
    %p53 = scmp.eq.s32.totalorder %s15, 3
    %p54 = por %p52, %p53
    %p55 = scmp.ne.s32.totalorder %s46, %s47
    %p56 = scmp.eq.s32.totalorder %s15, 0
    %p57 = por %p55, %p56
    %p58 = scmp.ne.s32.totalorder %s46, %s47
    %p59 = scmp.eq.s32.totalorder %s16, 3
    %p60 = por %p58, %p59
    %p62 = scmp.ne.s32.totalorder %s47, %s61
    %p63 = scmp.eq.s32.totalorder %s16, 0
    %p64 = por %p62, %p63
    %s66 = sadd.s32 %s65, 1
    %p69 = scmp.eq.s32.totalorder %s10, 3
    %p70 = scmp.ne.s32.totalorder %s65, %s67
    %p71 = scmp.eq.s32.totalorder %s10, 0
    %p72 = por %p70, %p71
    %p73 = scmp.ne.s32.totalorder %s65, %s67
    %p74 = scmp.eq.s32.totalorder %s15, 3
    %p75 = por %p73, %p74
    %p76 = scmp.ne.s32.totalorder %s67, %s68
    %p77 = scmp.eq.s32.totalorder %s15, 0
    %p78 = por %p76, %p77
    %p79 = scmp.ne.s32.totalorder %s67, %s68
    %p80 = scmp.eq.s32.totalorder %s16, 3
    %p81 = por %p79, %p80
    %p83 = scmp.ne.s32.totalorder %s68, %s82
    %p84 = scmp.eq.s32.totalorder %s16, 0
    %p85 = por %p83, %p84
    %s87 = sadd.s32 %s86, 1
    %p90 = scmp.eq.s32.totalorder %s10, 3
    %p91 = scmp.ne.s32.totalorder %s86, %s88
    %p92 = scmp.eq.s32.totalorder %s10, 0
    %p93 = por %p91, %p92
    %p94 = scmp.ne.s32.totalorder %s86, %s88
    %p95 = scmp.eq.s32.totalorder %s15, 3
    %p96 = por %p94, %p95
    %p97 = scmp.ne.s32.totalorder %s88, %s89
    %p98 = scmp.eq.s32.totalorder %s15, 0
    %p99 = por %p97, %p98
    %p100 = scmp.ne.s32.totalorder %s88, %s89
    %p101 = scmp.eq.s32.totalorder %s16, 3
    %p102 = por %p100, %p101
    %p104 = scmp.ne.s32.totalorder %s89, %s103
    %p105 = scmp.eq.s32.totalorder %s16, 0
    %p106 = por %p104, %p105
    %s107 = ssub.s32 %s10, %s17
    %p108 = scmp.eq.s32.totalorder %s107, 0
    %s110 = sadd.s32 %s109, 1
    %s111 = scalar_select %p108, %s109, %s110
    %p114 = pneg %p108
    %p115 = scmp.eq.s32.totalorder %s10, 3
    %p116 = por %p114, %p115
    %p117 = scmp.ne.s32.totalorder %s109, %s112
    %p118 = scmp.eq.s32.totalorder %s10, 0
    %p119 = por %p117, %p118
    %p120 = scmp.ne.s32.totalorder %s109, %s112
    %p121 = scmp.eq.s32.totalorder %s15, 3
    %p122 = por %p120, %p121
    %p123 = scmp.ne.s32.totalorder %s112, %s113
    %p124 = scmp.eq.s32.totalorder %s15, 0
    %p125 = por %p123, %p124
    %p126 = scmp.ne.s32.totalorder %s112, %s113
    %p127 = scmp.eq.s32.totalorder %s16, 3
    %p128 = por %p126, %p127
    %p130 = scmp.ne.s32.totalorder %s113, %s129
    %p131 = scmp.eq.s32.totalorder %s16, 0
    %p132 = por %p130, %p131
    %p133 = scmp.le.s32.totalorder 1, %s10
    %p134 = scmp.lt.s32.totalorder %s10, 5
    %p135 = pnand %p133, %p134
    %p136 = pneg %p135
    // Predicated region
    $region9: #{tpu_custom_call.1} parent=5 // pred_check
      _
    $region10: #{tpu_custom_call.1} parent=5 // pred_check_branch
      %138 = sbr.rel (%p135) target = $region12
    $region11: #{tpu_custom_call.1} parent=5 // pred_region
      %s139 = ssub.s32 %s10, 1
      // Predicated region
      $region13: #{tpu_custom_call.1} parent=11 // pred_check
        %p140 = pneg %p57
      $region14: #{tpu_custom_call.1} parent=11 // pred_check_branch
        %142 = sbr.rel (%p140) target = $region16
      $region15: #{tpu_custom_call.1} parent=11 // pred_region
        _
      $region16: #{tpu_custom_call.1} parent=11 // pred_fallthru
        _
      // Predicated region
      $region17: #{tpu_custom_call.1} parent=11 // pred_check
        %p143 = pneg %p78
      $region18: #{tpu_custom_call.1} parent=11 // pred_check_branch
        %145 = sbr.rel (%p143) target = $region20
      $region19: #{tpu_custom_call.1} parent=11 // pred_region
        _
      $region20: #{tpu_custom_call.1} parent=11 // pred_fallthru
        _
      // Predicated region
      $region21: #{tpu_custom_call.1} parent=11 // pred_check
        %p146 = pneg %p99
      $region22: #{tpu_custom_call.1} parent=11 // pred_check_branch
        %148 = sbr.rel (%p146) target = $region24
      $region23: #{tpu_custom_call.1} parent=11 // pred_region
        _
      $region24: #{tpu_custom_call.1} parent=11 // pred_fallthru
        _
    $region12: #{tpu_custom_call.1} parent=5 // pred_fallthru
      _
    %p149 = scmp.lt.s32.totalorder %s10, 4
    // Predicated region
    $region25: #{tpu_custom_call.1} parent=5 // pred_check
      %p150 = pneg %p149
    $region26: #{tpu_custom_call.1} parent=5 // pred_check_branch
      %152 = sbr.rel (%p150) target = $region28
    $region27: #{tpu_custom_call.1} parent=5 // pred_region
      // Predicated region
      $region29: #{tpu_custom_call.1} parent=27 // pred_check
        %p153 = pneg %p30
      $region30: #{tpu_custom_call.1} parent=27 // pred_check_branch
        %155 = sbr.rel (%p153) target = $region32
      $region31: #{tpu_custom_call.1} parent=27 // pred_region
        %s156 = smul.u32 64, %s10
        %p157 = scmp.lt.s32.totalorder %s156, 255
        %s158 = scalar_select %p157, %s156, 255
        %s159 = smul.addr %s158, 6
        %s160 = smul.addr %s159, 4
        %s161 = scalar_lea.vmem %s0, %s160
        %s162 = smul.u32 64, %s10
      $region32: #{tpu_custom_call.1} parent=27 // pred_fallthru
        _
    $region28: #{tpu_custom_call.1} parent=5 // pred_fallthru
      _
    %p163 = scmp.le.s32.totalorder 1, %s10
    %p164 = scmp.lt.s32.totalorder %s10, 5
    %p165 = pnand %p163, %p164
    %p166 = pneg %p165
    // Predicated region
    $region33: #{tpu_custom_call.1} parent=5 // pred_check
      _
    $region34: #{tpu_custom_call.1} parent=5 // pred_check_branch
      %168 = sbr.rel (%p165) target = $region36
    $region35: #{tpu_custom_call.1} parent=5 // pred_region
      %s169 = ssub.s32 %s10, 1
      %s170 = smul.u32 64, %s15
      %p171 = scmp.lt.s32.totalorder %s170, 255
      %s172 = scalar_select %p171, %s170, 255
      %s173 = smul.addr %s172, 6
      %s174 = smul.addr %s173, 4
      %s175 = scalar_lea.vmem %s0, %s174
      %p176 = pneg %p36
      %p177 = pneg %p33
      %p178 = pneg %p57
      %p179 = pneg %p54
      %p180 = pneg %p78
      %p181 = pneg %p75
      %p182 = pneg %p99
      %p183 = pneg %p96
      %p184 = pneg %p125
      %p185 = pneg %p122
      %s186 = smul.u32 64, %s15
      %p187 = scmp.lt.s32.totalorder %s186, 255
      %s188 = scalar_select %p187, %s186, 255
      %s189 = smul.addr %s188, 4
      %s190 = scalar_lea.vmem %s4, %s189
      %s191 = smul.u32 64, %s15
      %p192 = scmp.lt.s32.totalorder %s191, 255
      %s193 = scalar_select %p192, %s191, 255
      %s194 = smul.addr %s193, 6
      %s195 = smul.addr %s194, 4
      %s196 = scalar_lea.vmem %s0, %s195
      %s197 = smul.u32 64, %s15
      %s198 = smul.u32 64, %s15
      %p199 = scmp.lt.s32.totalorder %s198, 255
      %s200 = scalar_select %p199, %s198, 255
      %s201 = smul.addr %s200, 4
      %s202 = scalar_lea.vmem %s4, %s201
      %s203 = smul.u32 64, %s15
      %v205 = vld [vmem:[%s196] sm:$0xff]
      %v206 = vld [vmem:[%s196 + $0x8] sm:$0xff]
      %v207 = vld [vmem:[%s196 + $0x10] sm:$0xff]
      %v208 = vld [vmem:[%s196 + $0x18] sm:$0xff]
      %v209 = vld [vmem:[%s196 + $0x20] sm:$0xff]
      %v210 = vld [vmem:[%s196 + $0x28] sm:$0xff]
      %v211 = vld [vmem:[%s196 + $0x30] sm:$0xff]
      %v212 = vld [vmem:[%s196 + $0x38] sm:$0xff]
      %v213 = vld [vmem:[%s196 + $0x40] sm:$0xff]
      %v214 = vld [vmem:[%s196 + $0x48] sm:$0xff]
      %v215 = vld [vmem:[%s196 + $0x50] sm:$0xff]
      %v216 = vld [vmem:[%s196 + $0x58] sm:$0xff]
      %v217 = vld [vmem:[%s196 + $0x60] sm:$0xff]
      %v218 = vld [vmem:[%s196 + $0x68] sm:$0xff]
      %v219 = vld [vmem:[%s196 + $0x70] sm:$0xff]
      %v220 = vld [vmem:[%s196 + $0x78] sm:$0xff]
      %v221 = vld [vmem:[%s196 + $0x80] sm:$0xff]
      %v222 = vld [vmem:[%s196 + $0x88] sm:$0xff]
      %v223 = vld [vmem:[%s196 + $0x90] sm:$0xff]
      %v224 = vld [vmem:[%s196 + $0x98] sm:$0xff]
      %v225 = vld [vmem:[%s196 + $0xa0] sm:$0xff]
      %v226 = vld [vmem:[%s196 + $0xa8] sm:$0xff]
      %v227 = vld [vmem:[%s196 + $0xb0] sm:$0xff]
      %v228 = vld [vmem:[%s196 + $0xb8] sm:$0xff]
      %v229 = vld [vmem:[%s196 + $0xc0] sm:$0xff]
      %v230 = vld [vmem:[%s196 + $0xc8] sm:$0xff]
      %v231 = vld [vmem:[%s196 + $0xd0] sm:$0xff]
      %v232 = vld [vmem:[%s196 + $0xd8] sm:$0xff]
      %v233 = vld [vmem:[%s196 + $0xe0] sm:$0xff]
      %v234 = vld [vmem:[%s196 + $0xe8] sm:$0xff]
      %v235 = vld [vmem:[%s196 + $0xf0] sm:$0xff]
      %v236 = vld [vmem:[%s196 + $0xf8] sm:$0xff]
      %v237 = vld [vmem:[%s196 + $0x100] sm:$0xff]
      %v238 = vld [vmem:[%s196 + $0x108] sm:$0xff]
      %v239 = vld [vmem:[%s196 + $0x110] sm:$0xff]
      %v240 = vld [vmem:[%s196 + $0x118] sm:$0xff]
      %v241 = vld [vmem:[%s196 + $0x120] sm:$0xff]
      %v242 = vld [vmem:[%s196 + $0x128] sm:$0xff]
      %v243 = vld [vmem:[%s196 + $0x130] sm:$0xff]
      %v244 = vld [vmem:[%s196 + $0x138] sm:$0xff]
      %v245 = vld [vmem:[%s196 + $0x140] sm:$0xff]
      %v246 = vld [vmem:[%s196 + $0x148] sm:$0xff]
      %v247 = vld [vmem:[%s196 + $0x150] sm:$0xff]
      %v248 = vld [vmem:[%s196 + $0x158] sm:$0xff]
      %v249 = vld [vmem:[%s196 + $0x160] sm:$0xff]
      %v250 = vld [vmem:[%s196 + $0x168] sm:$0xff]
      %v251 = vld [vmem:[%s196 + $0x170] sm:$0xff]
      %v252 = vld [vmem:[%s196 + $0x178] sm:$0xff]
      %v253 = vld [vmem:[%s196 + $0x180] sm:$0xff]
      %v254 = vld [vmem:[%s196 + $0x188] sm:$0xff]
      %v255 = vld [vmem:[%s196 + $0x190] sm:$0xff]
      %v256 = vld [vmem:[%s196 + $0x198] sm:$0xff]
      %v257 = vld [vmem:[%s196 + $0x1a0] sm:$0xff]
      %v258 = vld [vmem:[%s196 + $0x1a8] sm:$0xff]
      %v259 = vld [vmem:[%s196 + $0x1b0] sm:$0xff]
      %v260 = vld [vmem:[%s196 + $0x1b8] sm:$0xff]
      %v261 = vld [vmem:[%s196 + $0x1c0] sm:$0xff]
      %v262 = vld [vmem:[%s196 + $0x1c8] sm:$0xff]
      %v263 = vld [vmem:[%s196 + $0x1d0] sm:$0xff]
      %v264 = vld [vmem:[%s196 + $0x1d8] sm:$0xff]
      %v265 = vld [vmem:[%s196 + $0x1e0] sm:$0xff]
      %v266 = vld [vmem:[%s196 + $0x1e8] sm:$0xff]
      %v267 = vld [vmem:[%s196 + $0x1f0] sm:$0xff]
      %v268 = vld [vmem:[%s196 + $0x1f8] sm:$0xff]
      %v269 = vld [vmem:[%s196 + $0x200] sm:$0xff]
      %v270 = vld [vmem:[%s196 + $0x208] sm:$0xff]
      %v271 = vld [vmem:[%s196 + $0x210] sm:$0xff]
      %v272 = vld [vmem:[%s196 + $0x218] sm:$0xff]
      %v273 = vld [vmem:[%s196 + $0x220] sm:$0xff]
      %v274 = vld [vmem:[%s196 + $0x228] sm:$0xff]
      %v275 = vld [vmem:[%s196 + $0x230] sm:$0xff]
      %v276 = vld [vmem:[%s196 + $0x238] sm:$0xff]
      %v277 = vld [vmem:[%s196 + $0x240] sm:$0xff]
      %v278 = vld [vmem:[%s196 + $0x248] sm:$0xff]
      %v279 = vld [vmem:[%s196 + $0x250] sm:$0xff]
      %v280 = vld [vmem:[%s196 + $0x258] sm:$0xff]
      %v281 = vld [vmem:[%s196 + $0x260] sm:$0xff]
      %v282 = vld [vmem:[%s196 + $0x268] sm:$0xff]
      %v283 = vld [vmem:[%s196 + $0x270] sm:$0xff]
      %v284 = vld [vmem:[%s196 + $0x278] sm:$0xff]
      %v285 = vld [vmem:[%s196 + $0x280] sm:$0xff]
      %v286 = vld [vmem:[%s196 + $0x288] sm:$0xff]
      %v287 = vld [vmem:[%s196 + $0x290] sm:$0xff]
      %v288 = vld [vmem:[%s196 + $0x298] sm:$0xff]
      %v289 = vld [vmem:[%s196 + $0x2a0] sm:$0xff]
      %v290 = vld [vmem:[%s196 + $0x2a8] sm:$0xff]
      %v291 = vld [vmem:[%s196 + $0x2b0] sm:$0xff]
      %v292 = vld [vmem:[%s196 + $0x2b8] sm:$0xff]
      %v293 = vld [vmem:[%s196 + $0x2c0] sm:$0xff]
      %v294 = vld [vmem:[%s196 + $0x2c8] sm:$0xff]
      %v295 = vld [vmem:[%s196 + $0x2d0] sm:$0xff]
      %v296 = vld [vmem:[%s196 + $0x2d8] sm:$0xff]
      %v297 = vld [vmem:[%s196 + $0x2e0] sm:$0xff]
      %v298 = vld [vmem:[%s196 + $0x2e8] sm:$0xff]
      %v299 = vld [vmem:[%s196 + $0x2f0] sm:$0xff]
      %v300 = vld [vmem:[%s196 + $0x2f8] sm:$0xff]
      %v301 = vld [vmem:[%s196 + $0x300] sm:$0xff]
      %v302 = vld [vmem:[%s196 + $0x308] sm:$0xff]
      %v303 = vld [vmem:[%s196 + $0x310] sm:$0xff]
      %v304 = vld [vmem:[%s196 + $0x318] sm:$0xff]
      %v305 = vld [vmem:[%s196 + $0x320] sm:$0xff]
      %v306 = vld [vmem:[%s196 + $0x328] sm:$0xff]
      %v307 = vld [vmem:[%s196 + $0x330] sm:$0xff]
      %v308 = vld [vmem:[%s196 + $0x338] sm:$0xff]
      %v309 = vld [vmem:[%s196 + $0x340] sm:$0xff]
      %v310 = vld [vmem:[%s196 + $0x348] sm:$0xff]
      %v311 = vld [vmem:[%s196 + $0x350] sm:$0xff]
      %v312 = vld [vmem:[%s196 + $0x358] sm:$0xff]
      %v313 = vld [vmem:[%s196 + $0x360] sm:$0xff]
      %v314 = vld [vmem:[%s196 + $0x368] sm:$0xff]
      %v315 = vld [vmem:[%s196 + $0x370] sm:$0xff]
      %v316 = vld [vmem:[%s196 + $0x378] sm:$0xff]
      %v317 = vld [vmem:[%s196 + $0x380] sm:$0xff]
      %v318 = vld [vmem:[%s196 + $0x388] sm:$0xff]
      %v319 = vld [vmem:[%s196 + $0x390] sm:$0xff]
      %v320 = vld [vmem:[%s196 + $0x398] sm:$0xff]
      %v321 = vld [vmem:[%s196 + $0x3a0] sm:$0xff]
      %v322 = vld [vmem:[%s196 + $0x3a8] sm:$0xff]
      %v323 = vld [vmem:[%s196 + $0x3b0] sm:$0xff]
      %v324 = vld [vmem:[%s196 + $0x3b8] sm:$0xff]
      %v325 = vld [vmem:[%s196 + $0x3c0] sm:$0xff]
      %v326 = vld [vmem:[%s196 + $0x3c8] sm:$0xff]
      %v327 = vld [vmem:[%s196 + $0x3d0] sm:$0xff]
      %v328 = vld [vmem:[%s196 + $0x3d8] sm:$0xff]
      %v329 = vld [vmem:[%s196 + $0x3e0] sm:$0xff]
      %v330 = vld [vmem:[%s196 + $0x3e8] sm:$0xff]
      %v331 = vld [vmem:[%s196 + $0x3f0] sm:$0xff]
      %v332 = vld [vmem:[%s196 + $0x3f8] sm:$0xff]
      %v333 = vld [vmem:[%s196 + $0x400] sm:$0xff]
      %v334 = vld [vmem:[%s196 + $0x408] sm:$0xff]
      %v335 = vld [vmem:[%s196 + $0x410] sm:$0xff]
      %v336 = vld [vmem:[%s196 + $0x418] sm:$0xff]
      %v337 = vld [vmem:[%s196 + $0x420] sm:$0xff]
      %v338 = vld [vmem:[%s196 + $0x428] sm:$0xff]
      %v339 = vld [vmem:[%s196 + $0x430] sm:$0xff]
      %v340 = vld [vmem:[%s196 + $0x438] sm:$0xff]
      %v341 = vld [vmem:[%s196 + $0x440] sm:$0xff]
      %v342 = vld [vmem:[%s196 + $0x448] sm:$0xff]
      %v343 = vld [vmem:[%s196 + $0x450] sm:$0xff]
      %v344 = vld [vmem:[%s196 + $0x458] sm:$0xff]
      %v345 = vld [vmem:[%s196 + $0x460] sm:$0xff]
      %v346 = vld [vmem:[%s196 + $0x468] sm:$0xff]
      %v347 = vld [vmem:[%s196 + $0x470] sm:$0xff]
      %v348 = vld [vmem:[%s196 + $0x478] sm:$0xff]
      %v349 = vld [vmem:[%s196 + $0x480] sm:$0xff]
      %v350 = vld [vmem:[%s196 + $0x488] sm:$0xff]
      %v351 = vld [vmem:[%s196 + $0x490] sm:$0xff]
      %v352 = vld [vmem:[%s196 + $0x498] sm:$0xff]
      %v353 = vld [vmem:[%s196 + $0x4a0] sm:$0xff]
      %v354 = vld [vmem:[%s196 + $0x4a8] sm:$0xff]
      %v355 = vld [vmem:[%s196 + $0x4b0] sm:$0xff]
      %v356 = vld [vmem:[%s196 + $0x4b8] sm:$0xff]
      %v357 = vld [vmem:[%s196 + $0x4c0] sm:$0xff]
      %v358 = vld [vmem:[%s196 + $0x4c8] sm:$0xff]
      %v359 = vld [vmem:[%s196 + $0x4d0] sm:$0xff]
      %v360 = vld [vmem:[%s196 + $0x4d8] sm:$0xff]
      %v361 = vld [vmem:[%s196 + $0x4e0] sm:$0xff]
      %v362 = vld [vmem:[%s196 + $0x4e8] sm:$0xff]
      %v363 = vld [vmem:[%s196 + $0x4f0] sm:$0xff]
      %v364 = vld [vmem:[%s196 + $0x4f8] sm:$0xff]
      %v365 = vld [vmem:[%s196 + $0x500] sm:$0xff]
      %v366 = vld [vmem:[%s196 + $0x508] sm:$0xff]
      %v367 = vld [vmem:[%s196 + $0x510] sm:$0xff]
      %v368 = vld [vmem:[%s196 + $0x518] sm:$0xff]
      %v369 = vld [vmem:[%s196 + $0x520] sm:$0xff]
      %v370 = vld [vmem:[%s196 + $0x528] sm:$0xff]
      %v371 = vld [vmem:[%s196 + $0x530] sm:$0xff]
      %v372 = vld [vmem:[%s196 + $0x538] sm:$0xff]
      %v373 = vld [vmem:[%s196 + $0x540] sm:$0xff]
      %v374 = vld [vmem:[%s196 + $0x548] sm:$0xff]
      %v375 = vld [vmem:[%s196 + $0x550] sm:$0xff]
      %v376 = vld [vmem:[%s196 + $0x558] sm:$0xff]
      %v377 = vld [vmem:[%s196 + $0x560] sm:$0xff]
      %v378 = vld [vmem:[%s196 + $0x568] sm:$0xff]
      %v379 = vld [vmem:[%s196 + $0x570] sm:$0xff]
      %v380 = vld [vmem:[%s196 + $0x578] sm:$0xff]
      %v381 = vld [vmem:[%s196 + $0x580] sm:$0xff]
      %v382 = vld [vmem:[%s196 + $0x588] sm:$0xff]
      %v383 = vld [vmem:[%s196 + $0x590] sm:$0xff]
      %v384 = vld [vmem:[%s196 + $0x598] sm:$0xff]
      %v385 = vld [vmem:[%s196 + $0x5a0] sm:$0xff]
      %v386 = vld [vmem:[%s196 + $0x5a8] sm:$0xff]
      %v387 = vld [vmem:[%s196 + $0x5b0] sm:$0xff]
      %v388 = vld [vmem:[%s196 + $0x5b8] sm:$0xff]
      %v389 = vld [vmem:[%s196 + $0x5c0] sm:$0xff]
      %v390 = vld [vmem:[%s196 + $0x5c8] sm:$0xff]
      %v391 = vld [vmem:[%s196 + $0x5d0] sm:$0xff]
      %v392 = vld [vmem:[%s196 + $0x5d8] sm:$0xff]
      %v393 = vld [vmem:[%s196 + $0x5e0] sm:$0xff]
      %v394 = vld [vmem:[%s196 + $0x5e8] sm:$0xff]
      %v395 = vld [vmem:[%s196 + $0x5f0] sm:$0xff]
      %v396 = vld [vmem:[%s196 + $0x5f8] sm:$0xff]
      %v397 = vld [vmem:[%s1] sm:$0xf]
      %v398 = vld [vmem:[%s1 + $0x4] sm:$0xf]
      %v399 = vld [vmem:[%s1 + $0x8] sm:$0xf]
      %v400 = vld [vmem:[%s1 + $0xc] sm:$0xf]
      %v401 = vld [vmem:[%s1 + $0x10] sm:$0xf]
      %v402 = vld [vmem:[%s1 + $0x14] sm:$0xf]
      %v403 = vld [vmem:[%s1 + $0x18] sm:$0xf]
      %v404 = vld [vmem:[%s1 + $0x1c] sm:$0xf]
      %v405 = vld [vmem:[%s1 + $0x20] sm:$0xf]
      %v406 = vld [vmem:[%s1 + $0x24] sm:$0xf]
      %v407 = vld [vmem:[%s1 + $0x28] sm:$0xf]
      %v408 = vld [vmem:[%s1 + $0x2c] sm:$0xf]
      %v409 = vld [vmem:[%s1 + $0x30] sm:$0xf]
      %v410 = vld [vmem:[%s1 + $0x34] sm:$0xf]
      %v411 = vld [vmem:[%s1 + $0x38] sm:$0xf]
      %v412 = vld [vmem:[%s1 + $0x3c] sm:$0xf]
      %v413 = vld [vmem:[%s1 + $0x40] sm:$0xf]
      %v414 = vld [vmem:[%s1 + $0x44] sm:$0xf]
      %v415 = vld [vmem:[%s1 + $0x48] sm:$0xf]
      %v416 = vld [vmem:[%s1 + $0x4c] sm:$0xf]
      %v417 = vld [vmem:[%s1 + $0x50] sm:$0xf]
      %v418 = vld [vmem:[%s1 + $0x54] sm:$0xf]
      %v419 = vld [vmem:[%s1 + $0x58] sm:$0xf]
      %v420 = vld [vmem:[%s1 + $0x5c] sm:$0xf]
      %v421 = vld [vmem:[%s1 + $0x60] sm:$0xf]
      %v422 = vld [vmem:[%s1 + $0x64] sm:$0xf]
      %v423 = vld [vmem:[%s1 + $0x68] sm:$0xf]
      %v424 = vld [vmem:[%s1 + $0x6c] sm:$0xf]
      %v425 = vld [vmem:[%s1 + $0x70] sm:$0xf]
      %v426 = vld [vmem:[%s1 + $0x74] sm:$0xf]
      %v427 = vld [vmem:[%s1 + $0x78] sm:$0xf]
      %v428 = vld [vmem:[%s1 + $0x7c] sm:$0xf]
      %v429 = vld [vmem:[%s1 + $0x80] sm:$0xf]
      %v430 = vld [vmem:[%s1 + $0x84] sm:$0xf]
      %v431 = vld [vmem:[%s1 + $0x88] sm:$0xf]
      %v432 = vld [vmem:[%s1 + $0x8c] sm:$0xf]
      %v433 = vld [vmem:[%s1 + $0x90] sm:$0xf]
      %v434 = vld [vmem:[%s1 + $0x94] sm:$0xf]
      %v435 = vld [vmem:[%s1 + $0x98] sm:$0xf]
      %v436 = vld [vmem:[%s1 + $0x9c] sm:$0xf]
      %v437 = vld [vmem:[%s1 + $0xa0] sm:$0xf]
      %v438 = vld [vmem:[%s1 + $0xa4] sm:$0xf]
      %v439 = vld [vmem:[%s1 + $0xa8] sm:$0xf]
      %v440 = vld [vmem:[%s1 + $0xac] sm:$0xf]
      %v441 = vld [vmem:[%s1 + $0xb0] sm:$0xf]
      %v442 = vld [vmem:[%s1 + $0xb4] sm:$0xf]
      %v443 = vld [vmem:[%s1 + $0xb8] sm:$0xf]
      %v444 = vld [vmem:[%s1 + $0xbc] sm:$0xf]
      %v445 = vld [vmem:[%s1 + $0xc0] sm:$0xf]
      %v446 = vld [vmem:[%s1 + $0xc4] sm:$0xf]
      %v447 = vld [vmem:[%s1 + $0xc8] sm:$0xf]
      %v448 = vld [vmem:[%s1 + $0xcc] sm:$0xf]
      %v449 = vld [vmem:[%s1 + $0xd0] sm:$0xf]
      %v450 = vld [vmem:[%s1 + $0xd4] sm:$0xf]
      %v451 = vld [vmem:[%s1 + $0xd8] sm:$0xf]
      %v452 = vld [vmem:[%s1 + $0xdc] sm:$0xf]
      %v453 = vld [vmem:[%s1 + $0xe0] sm:$0xf]
      %v454 = vld [vmem:[%s1 + $0xe4] sm:$0xf]
      %v455 = vld [vmem:[%s1 + $0xe8] sm:$0xf]
      %v456 = vld [vmem:[%s1 + $0xec] sm:$0xf]
      %v457 = vld [vmem:[%s1 + $0xf0] sm:$0xf]
      %v458 = vld [vmem:[%s1 + $0xf4] sm:$0xf]
      %v459 = vld [vmem:[%s1 + $0xf8] sm:$0xf]
      %v460 = vld [vmem:[%s1 + $0xfc] sm:$0xf]
      %v461 = vld [vmem:[%s1 + $0x100] sm:$0xf]
      %v462 = vld [vmem:[%s1 + $0x104] sm:$0xf]
      %v463 = vld [vmem:[%s1 + $0x108] sm:$0xf]
      %v464 = vld [vmem:[%s1 + $0x10c] sm:$0xf]
      %v465 = vld [vmem:[%s1 + $0x110] sm:$0xf]
      %v466 = vld [vmem:[%s1 + $0x114] sm:$0xf]
      %v467 = vld [vmem:[%s1 + $0x118] sm:$0xf]
      %v468 = vld [vmem:[%s1 + $0x11c] sm:$0xf]
      %v469 = vld [vmem:[%s1 + $0x120] sm:$0xf]
      %v470 = vld [vmem:[%s1 + $0x124] sm:$0xf]
      %v471 = vld [vmem:[%s1 + $0x128] sm:$0xf]
      %v472 = vld [vmem:[%s1 + $0x12c] sm:$0xf]
      %v473 = vld [vmem:[%s1 + $0x130] sm:$0xf]
      %v474 = vld [vmem:[%s1 + $0x134] sm:$0xf]
      %v475 = vld [vmem:[%s1 + $0x138] sm:$0xf]
      %v476 = vld [vmem:[%s1 + $0x13c] sm:$0xf]
      %v477 = vld [vmem:[%s1 + $0x140] sm:$0xf]
      %v478 = vld [vmem:[%s1 + $0x144] sm:$0xf]
      %v479 = vld [vmem:[%s1 + $0x148] sm:$0xf]
      %v480 = vld [vmem:[%s1 + $0x14c] sm:$0xf]
      %v481 = vld [vmem:[%s1 + $0x150] sm:$0xf]
      %v482 = vld [vmem:[%s1 + $0x154] sm:$0xf]
      %v483 = vld [vmem:[%s1 + $0x158] sm:$0xf]
      %v484 = vld [vmem:[%s1 + $0x15c] sm:$0xf]
      %v485 = vld [vmem:[%s1 + $0x160] sm:$0xf]
      %v486 = vld [vmem:[%s1 + $0x164] sm:$0xf]
      %v487 = vld [vmem:[%s1 + $0x168] sm:$0xf]
      %v488 = vld [vmem:[%s1 + $0x16c] sm:$0xf]
      %v681 = vunpack.c.l.b16 %v205
      %v682 = vunpack.c.h.b16 %v205
      %v683 = vunpack.c.l.b16 %v206
      %v684 = vunpack.c.h.b16 %v206
      %v685 = vunpack.c.l.b16 %v207
      %v686 = vunpack.c.h.b16 %v207
      %v687 = vunpack.c.l.b16 %v208
      %v688 = vunpack.c.h.b16 %v208
      %v689 = vunpack.c.l.b16 %v209
      %v690 = vunpack.c.h.b16 %v209
      %v691 = vunpack.c.l.b16 %v210
      %v692 = vunpack.c.h.b16 %v210
      %v693 = vunpack.c.l.b16 %v211
      %v694 = vunpack.c.h.b16 %v211
      %v695 = vunpack.c.l.b16 %v212
      %v696 = vunpack.c.h.b16 %v212
      %v697 = vunpack.c.l.b16 %v213
      %v698 = vunpack.c.h.b16 %v213
      %v699 = vunpack.c.l.b16 %v214
      %v700 = vunpack.c.h.b16 %v214
      %v701 = vunpack.c.l.b16 %v215
      %v702 = vunpack.c.h.b16 %v215
      %v703 = vunpack.c.l.b16 %v216
      %v704 = vunpack.c.h.b16 %v216
      %v705 = vunpack.c.l.b16 %v217
      %v706 = vunpack.c.h.b16 %v217
      %v707 = vunpack.c.l.b16 %v218
      %v708 = vunpack.c.h.b16 %v218
      %v709 = vunpack.c.l.b16 %v219
      %v710 = vunpack.c.h.b16 %v219
      %v711 = vunpack.c.l.b16 %v220
      %v712 = vunpack.c.h.b16 %v220
      %v713 = vunpack.c.l.b16 %v221
      %v714 = vunpack.c.h.b16 %v221
      %v715 = vunpack.c.l.b16 %v222
      %v716 = vunpack.c.h.b16 %v222
      %v717 = vunpack.c.l.b16 %v223
      %v718 = vunpack.c.h.b16 %v223
      %v719 = vunpack.c.l.b16 %v224
      %v720 = vunpack.c.h.b16 %v224
      %v721 = vunpack.c.l.b16 %v225
      %v722 = vunpack.c.h.b16 %v225
      %v723 = vunpack.c.l.b16 %v226
      %v724 = vunpack.c.h.b16 %v226
      %v725 = vunpack.c.l.b16 %v227
      %v726 = vunpack.c.h.b16 %v227
      %v727 = vunpack.c.l.b16 %v228
      %v728 = vunpack.c.h.b16 %v228
      %v729 = vunpack.c.l.b16 %v229
      %v730 = vunpack.c.h.b16 %v229
      %v731 = vunpack.c.l.b16 %v230
      %v732 = vunpack.c.h.b16 %v230
      %v733 = vunpack.c.l.b16 %v231
      %v734 = vunpack.c.h.b16 %v231
      %v735 = vunpack.c.l.b16 %v232
      %v736 = vunpack.c.h.b16 %v232
      %v737 = vunpack.c.l.b16 %v233
      %v738 = vunpack.c.h.b16 %v233
      %v739 = vunpack.c.l.b16 %v234
      %v740 = vunpack.c.h.b16 %v234
      %v741 = vunpack.c.l.b16 %v235
      %v742 = vunpack.c.h.b16 %v235
      %v743 = vunpack.c.l.b16 %v236
      %v744 = vunpack.c.h.b16 %v236
      %v745 = vunpack.c.l.b16 %v237
      %v746 = vunpack.c.h.b16 %v237
      %v747 = vunpack.c.l.b16 %v238
      %v748 = vunpack.c.h.b16 %v238
      %v749 = vunpack.c.l.b16 %v239
      %v750 = vunpack.c.h.b16 %v239
      %v751 = vunpack.c.l.b16 %v240
      %v752 = vunpack.c.h.b16 %v240
      %v753 = vunpack.c.l.b16 %v241
      %v754 = vunpack.c.h.b16 %v241
      %v755 = vunpack.c.l.b16 %v242
      %v756 = vunpack.c.h.b16 %v242
      %v757 = vunpack.c.l.b16 %v243
      %v758 = vunpack.c.h.b16 %v243
      %v759 = vunpack.c.l.b16 %v244
      %v760 = vunpack.c.h.b16 %v244
      %v761 = vunpack.c.l.b16 %v245
      %v762 = vunpack.c.h.b16 %v245
      %v763 = vunpack.c.l.b16 %v246
      %v764 = vunpack.c.h.b16 %v246
      %v765 = vunpack.c.l.b16 %v247
      %v766 = vunpack.c.h.b16 %v247
      %v767 = vunpack.c.l.b16 %v248
      %v768 = vunpack.c.h.b16 %v248
      %v769 = vunpack.c.l.b16 %v249
      %v770 = vunpack.c.h.b16 %v249
      %v771 = vunpack.c.l.b16 %v250
      %v772 = vunpack.c.h.b16 %v250
      %v773 = vunpack.c.l.b16 %v251
      %v774 = vunpack.c.h.b16 %v251
      %v775 = vunpack.c.l.b16 %v252
      %v776 = vunpack.c.h.b16 %v252
      %v777 = vunpack.c.l.b16 %v253
      %v778 = vunpack.c.h.b16 %v253
      %v779 = vunpack.c.l.b16 %v254
      %v780 = vunpack.c.h.b16 %v254
      %v781 = vunpack.c.l.b16 %v255
      %v782 = vunpack.c.h.b16 %v255
      %v783 = vunpack.c.l.b16 %v256
      %v784 = vunpack.c.h.b16 %v256
      %v785 = vunpack.c.l.b16 %v257
      %v786 = vunpack.c.h.b16 %v257
      %v787 = vunpack.c.l.b16 %v258
      %v788 = vunpack.c.h.b16 %v258
      %v789 = vunpack.c.l.b16 %v259
      %v790 = vunpack.c.h.b16 %v259
      %v791 = vunpack.c.l.b16 %v260
      %v792 = vunpack.c.h.b16 %v260
      %v793 = vunpack.c.l.b16 %v261
      %v794 = vunpack.c.h.b16 %v261
      %v795 = vunpack.c.l.b16 %v262
      %v796 = vunpack.c.h.b16 %v262
      %v797 = vunpack.c.l.b16 %v263
      %v798 = vunpack.c.h.b16 %v263
      %v799 = vunpack.c.l.b16 %v264
      %v800 = vunpack.c.h.b16 %v264
      %v801 = vunpack.c.l.b16 %v265
      %v802 = vunpack.c.h.b16 %v265
      %v803 = vunpack.c.l.b16 %v266
      %v804 = vunpack.c.h.b16 %v266
      %v805 = vunpack.c.l.b16 %v267
      %v806 = vunpack.c.h.b16 %v267
      %v807 = vunpack.c.l.b16 %v268
      %v808 = vunpack.c.h.b16 %v268
      %v809 = vunpack.c.l.b16 %v269
      %v810 = vunpack.c.h.b16 %v269
      %v811 = vunpack.c.l.b16 %v270
      %v812 = vunpack.c.h.b16 %v270
      %v813 = vunpack.c.l.b16 %v271
      %v814 = vunpack.c.h.b16 %v271
      %v815 = vunpack.c.l.b16 %v272
      %v816 = vunpack.c.h.b16 %v272
      %v817 = vunpack.c.l.b16 %v273
      %v818 = vunpack.c.h.b16 %v273
      %v819 = vunpack.c.l.b16 %v274
      %v820 = vunpack.c.h.b16 %v274
      %v821 = vunpack.c.l.b16 %v275
      %v822 = vunpack.c.h.b16 %v275
      %v823 = vunpack.c.l.b16 %v276
      %v824 = vunpack.c.h.b16 %v276
      %v825 = vunpack.c.l.b16 %v277
      %v826 = vunpack.c.h.b16 %v277
      %v827 = vunpack.c.l.b16 %v278
      %v828 = vunpack.c.h.b16 %v278
      %v829 = vunpack.c.l.b16 %v279
      %v830 = vunpack.c.h.b16 %v279
      %v831 = vunpack.c.l.b16 %v280
      %v832 = vunpack.c.h.b16 %v280
      %v833 = vunpack.c.l.b16 %v281
      %v834 = vunpack.c.h.b16 %v281
      %v835 = vunpack.c.l.b16 %v282
      %v836 = vunpack.c.h.b16 %v282
      %v837 = vunpack.c.l.b16 %v283
      %v838 = vunpack.c.h.b16 %v283
      %v839 = vunpack.c.l.b16 %v284
      %v840 = vunpack.c.h.b16 %v284
      %v841 = vunpack.c.l.b16 %v285
      %v842 = vunpack.c.h.b16 %v285
      %v843 = vunpack.c.l.b16 %v286
      %v844 = vunpack.c.h.b16 %v286
      %v845 = vunpack.c.l.b16 %v287
      %v846 = vunpack.c.h.b16 %v287
      %v847 = vunpack.c.l.b16 %v288
      %v848 = vunpack.c.h.b16 %v288
      %v849 = vunpack.c.l.b16 %v289
      %v850 = vunpack.c.h.b16 %v289
      %v851 = vunpack.c.l.b16 %v290
      %v852 = vunpack.c.h.b16 %v290
      %v853 = vunpack.c.l.b16 %v291
      %v854 = vunpack.c.h.b16 %v291
      %v855 = vunpack.c.l.b16 %v292
      %v856 = vunpack.c.h.b16 %v292
      %v857 = vunpack.c.l.b16 %v293
      %v858 = vunpack.c.h.b16 %v293
      %v859 = vunpack.c.l.b16 %v294
      %v860 = vunpack.c.h.b16 %v294
      %v861 = vunpack.c.l.b16 %v295
      %v862 = vunpack.c.h.b16 %v295
      %v863 = vunpack.c.l.b16 %v296
      %v864 = vunpack.c.h.b16 %v296
      %v865 = vunpack.c.l.b16 %v297
      %v866 = vunpack.c.h.b16 %v297
      %v867 = vunpack.c.l.b16 %v298
      %v868 = vunpack.c.h.b16 %v298
      %v869 = vunpack.c.l.b16 %v299
      %v870 = vunpack.c.h.b16 %v299
      %v871 = vunpack.c.l.b16 %v300
      %v872 = vunpack.c.h.b16 %v300
      %v873 = vunpack.c.l.b16 %v301
      %v874 = vunpack.c.h.b16 %v301
      %v875 = vunpack.c.l.b16 %v302
      %v876 = vunpack.c.h.b16 %v302
      %v877 = vunpack.c.l.b16 %v303
      %v878 = vunpack.c.h.b16 %v303
      %v879 = vunpack.c.l.b16 %v304
      %v880 = vunpack.c.h.b16 %v304
      %v881 = vunpack.c.l.b16 %v305
      %v882 = vunpack.c.h.b16 %v305
      %v883 = vunpack.c.l.b16 %v306
      %v884 = vunpack.c.h.b16 %v306
      %v885 = vunpack.c.l.b16 %v307
      %v886 = vunpack.c.h.b16 %v307
      %v887 = vunpack.c.l.b16 %v308
      %v888 = vunpack.c.h.b16 %v308
      %v889 = vunpack.c.l.b16 %v309
      %v890 = vunpack.c.h.b16 %v309
      %v891 = vunpack.c.l.b16 %v310
      %v892 = vunpack.c.h.b16 %v310
      %v893 = vunpack.c.l.b16 %v311
      %v894 = vunpack.c.h.b16 %v311
      %v895 = vunpack.c.l.b16 %v312
      %v896 = vunpack.c.h.b16 %v312
      %v897 = vunpack.c.l.b16 %v313
      %v898 = vunpack.c.h.b16 %v313
      %v899 = vunpack.c.l.b16 %v314
      %v900 = vunpack.c.h.b16 %v314
      %v901 = vunpack.c.l.b16 %v315
      %v902 = vunpack.c.h.b16 %v315
      %v903 = vunpack.c.l.b16 %v316
      %v904 = vunpack.c.h.b16 %v316
      %v905 = vunpack.c.l.b16 %v317
      %v906 = vunpack.c.h.b16 %v317
      %v907 = vunpack.c.l.b16 %v318
      %v908 = vunpack.c.h.b16 %v318
      %v909 = vunpack.c.l.b16 %v319
      %v910 = vunpack.c.h.b16 %v319
      %v911 = vunpack.c.l.b16 %v320
      %v912 = vunpack.c.h.b16 %v320
      %v913 = vunpack.c.l.b16 %v321
      %v914 = vunpack.c.h.b16 %v321
      %v915 = vunpack.c.l.b16 %v322
      %v916 = vunpack.c.h.b16 %v322
      %v917 = vunpack.c.l.b16 %v323
      %v918 = vunpack.c.h.b16 %v323
      %v919 = vunpack.c.l.b16 %v324
      %v920 = vunpack.c.h.b16 %v324
      %v921 = vunpack.c.l.b16 %v325
      %v922 = vunpack.c.h.b16 %v325
      %v923 = vunpack.c.l.b16 %v326
      %v924 = vunpack.c.h.b16 %v326
      %v925 = vunpack.c.l.b16 %v327
      %v926 = vunpack.c.h.b16 %v327
      %v927 = vunpack.c.l.b16 %v328
      %v928 = vunpack.c.h.b16 %v328
      %v929 = vunpack.c.l.b16 %v329
      %v930 = vunpack.c.h.b16 %v329
      %v931 = vunpack.c.l.b16 %v330
      %v932 = vunpack.c.h.b16 %v330
      %v933 = vunpack.c.l.b16 %v331
      %v934 = vunpack.c.h.b16 %v331
      %v935 = vunpack.c.l.b16 %v332
      %v936 = vunpack.c.h.b16 %v332
      %v937 = vunpack.c.l.b16 %v333
      %v938 = vunpack.c.h.b16 %v333
      %v939 = vunpack.c.l.b16 %v334
      %v940 = vunpack.c.h.b16 %v334
      %v941 = vunpack.c.l.b16 %v335
      %v942 = vunpack.c.h.b16 %v335
      %v943 = vunpack.c.l.b16 %v336
      %v944 = vunpack.c.h.b16 %v336
      %v945 = vunpack.c.l.b16 %v337
      %v946 = vunpack.c.h.b16 %v337
      %v947 = vunpack.c.l.b16 %v338
      %v948 = vunpack.c.h.b16 %v338
      %v949 = vunpack.c.l.b16 %v339
      %v950 = vunpack.c.h.b16 %v339
      %v951 = vunpack.c.l.b16 %v340
      %v952 = vunpack.c.h.b16 %v340
      %v953 = vunpack.c.l.b16 %v341
      %v954 = vunpack.c.h.b16 %v341
      %v955 = vunpack.c.l.b16 %v342
      %v956 = vunpack.c.h.b16 %v342
      %v957 = vunpack.c.l.b16 %v343
      %v958 = vunpack.c.h.b16 %v343
      %v959 = vunpack.c.l.b16 %v344
      %v960 = vunpack.c.h.b16 %v344
      %v961 = vunpack.c.l.b16 %v345
      %v962 = vunpack.c.h.b16 %v345
      %v963 = vunpack.c.l.b16 %v346
      %v964 = vunpack.c.h.b16 %v346
      %v965 = vunpack.c.l.b16 %v347
      %v966 = vunpack.c.h.b16 %v347
      %v967 = vunpack.c.l.b16 %v348
      %v968 = vunpack.c.h.b16 %v348
      %v969 = vunpack.c.l.b16 %v349
      %v970 = vunpack.c.h.b16 %v349
      %v971 = vunpack.c.l.b16 %v350
      %v972 = vunpack.c.h.b16 %v350
      %v973 = vunpack.c.l.b16 %v351
      %v974 = vunpack.c.h.b16 %v351
      %v975 = vunpack.c.l.b16 %v352
      %v976 = vunpack.c.h.b16 %v352
      %v977 = vunpack.c.l.b16 %v353
      %v978 = vunpack.c.h.b16 %v353
      %v979 = vunpack.c.l.b16 %v354
      %v980 = vunpack.c.h.b16 %v354
      %v981 = vunpack.c.l.b16 %v355
      %v982 = vunpack.c.h.b16 %v355
      %v983 = vunpack.c.l.b16 %v356
      %v984 = vunpack.c.h.b16 %v356
      %v985 = vunpack.c.l.b16 %v357
      %v986 = vunpack.c.h.b16 %v357
      %v987 = vunpack.c.l.b16 %v358
      %v988 = vunpack.c.h.b16 %v358
      %v989 = vunpack.c.l.b16 %v359
      %v990 = vunpack.c.h.b16 %v359
      %v991 = vunpack.c.l.b16 %v360
      %v992 = vunpack.c.h.b16 %v360
      %v993 = vunpack.c.l.b16 %v361
      %v994 = vunpack.c.h.b16 %v361
      %v995 = vunpack.c.l.b16 %v362
      %v996 = vunpack.c.h.b16 %v362
      %v997 = vunpack.c.l.b16 %v363
      %v998 = vunpack.c.h.b16 %v363
      %v999 = vunpack.c.l.b16 %v364
      %v1000 = vunpack.c.h.b16 %v364
      %v1001 = vunpack.c.l.b16 %v365
      %v1002 = vunpack.c.h.b16 %v365
      %v1003 = vunpack.c.l.b16 %v366
      %v1004 = vunpack.c.h.b16 %v366
      %v1005 = vunpack.c.l.b16 %v367
      %v1006 = vunpack.c.h.b16 %v367
      %v1007 = vunpack.c.l.b16 %v368
      %v1008 = vunpack.c.h.b16 %v368
      %v1009 = vunpack.c.l.b16 %v369
      %v1010 = vunpack.c.h.b16 %v369
      %v1011 = vunpack.c.l.b16 %v370
      %v1012 = vunpack.c.h.b16 %v370
      %v1013 = vunpack.c.l.b16 %v371
      %v1014 = vunpack.c.h.b16 %v371
      %v1015 = vunpack.c.l.b16 %v372
      %v1016 = vunpack.c.h.b16 %v372
      %v1017 = vunpack.c.l.b16 %v373
      %v1018 = vunpack.c.h.b16 %v373
      %v1019 = vunpack.c.l.b16 %v374
      %v1020 = vunpack.c.h.b16 %v374
      %v1021 = vunpack.c.l.b16 %v375
      %v1022 = vunpack.c.h.b16 %v375
      %v1023 = vunpack.c.l.b16 %v376
      %v1024 = vunpack.c.h.b16 %v376
      %v1025 = vunpack.c.l.b16 %v377
      %v1026 = vunpack.c.h.b16 %v377
      %v1027 = vunpack.c.l.b16 %v378
      %v1028 = vunpack.c.h.b16 %v378
      %v1029 = vunpack.c.l.b16 %v379
      %v1030 = vunpack.c.h.b16 %v379
      %v1031 = vunpack.c.l.b16 %v380
      %v1032 = vunpack.c.h.b16 %v380
      %v1033 = vunpack.c.l.b16 %v381
      %v1034 = vunpack.c.h.b16 %v381
      %v1035 = vunpack.c.l.b16 %v382
      %v1036 = vunpack.c.h.b16 %v382
      %v1037 = vunpack.c.l.b16 %v383
      %v1038 = vunpack.c.h.b16 %v383
      %v1039 = vunpack.c.l.b16 %v384
      %v1040 = vunpack.c.h.b16 %v384
      %v1041 = vunpack.c.l.b16 %v385
      %v1042 = vunpack.c.h.b16 %v385
      %v1043 = vunpack.c.l.b16 %v386
      %v1044 = vunpack.c.h.b16 %v386
      %v1045 = vunpack.c.l.b16 %v387
      %v1046 = vunpack.c.h.b16 %v387
      %v1047 = vunpack.c.l.b16 %v388
      %v1048 = vunpack.c.h.b16 %v388
      %v1049 = vunpack.c.l.b16 %v389
      %v1050 = vunpack.c.h.b16 %v389
      %v1051 = vunpack.c.l.b16 %v390
      %v1052 = vunpack.c.h.b16 %v390
      %v1053 = vunpack.c.l.b16 %v391
      %v1054 = vunpack.c.h.b16 %v391
      %v1055 = vunpack.c.l.b16 %v392
      %v1056 = vunpack.c.h.b16 %v392
      %v1057 = vunpack.c.l.b16 %v393
      %v1058 = vunpack.c.h.b16 %v393
      %v1059 = vunpack.c.l.b16 %v394
      %v1060 = vunpack.c.h.b16 %v394
      %v1061 = vunpack.c.l.b16 %v395
      %v1062 = vunpack.c.h.b16 %v395
      %v1063 = vunpack.c.l.b16 %v396
      %v1064 = vunpack.c.h.b16 %v396
      %v1065 = vpack.c.b16 %v687, %v681
      %v1066 = vpack.c.b16 %v688, %v682
      %v1067 = vpack.c.b16 %v689, %v683
      %v1068 = vpack.c.b16 %v690, %v684
      %v1069 = vpack.c.b16 %v691, %v685
      %v1070 = vpack.c.b16 %v692, %v686
      %v1071 = vpack.c.b16 %v699, %v693
      %v1072 = vpack.c.b16 %v700, %v694
      %v1073 = vpack.c.b16 %v701, %v695
      %v1074 = vpack.c.b16 %v702, %v696
      %v1075 = vpack.c.b16 %v703, %v697
      %v1076 = vpack.c.b16 %v704, %v698
      %v1077 = vpack.c.b16 %v711, %v705
      %v1078 = vpack.c.b16 %v712, %v706
      %v1079 = vpack.c.b16 %v713, %v707
      %v1080 = vpack.c.b16 %v714, %v708
      %v1081 = vpack.c.b16 %v715, %v709
      %v1082 = vpack.c.b16 %v716, %v710
      %v1083 = vpack.c.b16 %v723, %v717
      %v1084 = vpack.c.b16 %v724, %v718
      %v1085 = vpack.c.b16 %v725, %v719
      %v1086 = vpack.c.b16 %v726, %v720
      %v1087 = vpack.c.b16 %v727, %v721
      %v1088 = vpack.c.b16 %v728, %v722
      %v1089 = vpack.c.b16 %v735, %v729
      %v1090 = vpack.c.b16 %v736, %v730
      %v1091 = vpack.c.b16 %v737, %v731
      %v1092 = vpack.c.b16 %v738, %v732
      %v1093 = vpack.c.b16 %v739, %v733
      %v1094 = vpack.c.b16 %v740, %v734
      %v1095 = vpack.c.b16 %v747, %v741
      %v1096 = vpack.c.b16 %v748, %v742
      %v1097 = vpack.c.b16 %v749, %v743
      %v1098 = vpack.c.b16 %v750, %v744
      %v1099 = vpack.c.b16 %v751, %v745
      %v1100 = vpack.c.b16 %v752, %v746
      %v1101 = vpack.c.b16 %v759, %v753
      %v1102 = vpack.c.b16 %v760, %v754
      %v1103 = vpack.c.b16 %v761, %v755
      %v1104 = vpack.c.b16 %v762, %v756
      %v1105 = vpack.c.b16 %v763, %v757
      %v1106 = vpack.c.b16 %v764, %v758
      %v1107 = vpack.c.b16 %v771, %v765
      %v1108 = vpack.c.b16 %v772, %v766
      %v1109 = vpack.c.b16 %v773, %v767
      %v1110 = vpack.c.b16 %v774, %v768
      %v1111 = vpack.c.b16 %v775, %v769
      %v1112 = vpack.c.b16 %v776, %v770
      %v1113 = vpack.c.b16 %v783, %v777
      %v1114 = vpack.c.b16 %v784, %v778
      %v1115 = vpack.c.b16 %v785, %v779
      %v1116 = vpack.c.b16 %v786, %v780
      %v1117 = vpack.c.b16 %v787, %v781
      %v1118 = vpack.c.b16 %v788, %v782
      %v1119 = vpack.c.b16 %v795, %v789
      %v1120 = vpack.c.b16 %v796, %v790
      %v1121 = vpack.c.b16 %v797, %v791
      %v1122 = vpack.c.b16 %v798, %v792
      %v1123 = vpack.c.b16 %v799, %v793
      %v1124 = vpack.c.b16 %v800, %v794
      %v1125 = vpack.c.b16 %v807, %v801
      %v1126 = vpack.c.b16 %v808, %v802
      %v1127 = vpack.c.b16 %v809, %v803
      %v1128 = vpack.c.b16 %v810, %v804
      %v1129 = vpack.c.b16 %v811, %v805
      %v1130 = vpack.c.b16 %v812, %v806
      %v1131 = vpack.c.b16 %v819, %v813
      %v1132 = vpack.c.b16 %v820, %v814
      %v1133 = vpack.c.b16 %v821, %v815
      %v1134 = vpack.c.b16 %v822, %v816
      %v1135 = vpack.c.b16 %v823, %v817
      %v1136 = vpack.c.b16 %v824, %v818
      %v1137 = vpack.c.b16 %v831, %v825
      %v1138 = vpack.c.b16 %v832, %v826
      %v1139 = vpack.c.b16 %v833, %v827
      %v1140 = vpack.c.b16 %v834, %v828
      %v1141 = vpack.c.b16 %v835, %v829
      %v1142 = vpack.c.b16 %v836, %v830
      %v1143 = vpack.c.b16 %v843, %v837
      %v1144 = vpack.c.b16 %v844, %v838
      %v1145 = vpack.c.b16 %v845, %v839
      %v1146 = vpack.c.b16 %v846, %v840
      %v1147 = vpack.c.b16 %v847, %v841
      %v1148 = vpack.c.b16 %v848, %v842
      %v1149 = vpack.c.b16 %v855, %v849
      %v1150 = vpack.c.b16 %v856, %v850
      %v1151 = vpack.c.b16 %v857, %v851
      %v1152 = vpack.c.b16 %v858, %v852
      %v1153 = vpack.c.b16 %v859, %v853
      %v1154 = vpack.c.b16 %v860, %v854
      %v1155 = vpack.c.b16 %v867, %v861
      %v1156 = vpack.c.b16 %v868, %v862
      %v1157 = vpack.c.b16 %v869, %v863
      %v1158 = vpack.c.b16 %v870, %v864
      %v1159 = vpack.c.b16 %v871, %v865
      %v1160 = vpack.c.b16 %v872, %v866
      %v1161 = vpack.c.b16 %v879, %v873
      %v1162 = vpack.c.b16 %v880, %v874
      %v1163 = vpack.c.b16 %v881, %v875
      %v1164 = vpack.c.b16 %v882, %v876
      %v1165 = vpack.c.b16 %v883, %v877
      %v1166 = vpack.c.b16 %v884, %v878
      %v1167 = vpack.c.b16 %v891, %v885
      %v1168 = vpack.c.b16 %v892, %v886
      %v1169 = vpack.c.b16 %v893, %v887
      %v1170 = vpack.c.b16 %v894, %v888
      %v1171 = vpack.c.b16 %v895, %v889
      %v1172 = vpack.c.b16 %v896, %v890
      %v1173 = vpack.c.b16 %v903, %v897
      %v1174 = vpack.c.b16 %v904, %v898
      %v1175 = vpack.c.b16 %v905, %v899
      %v1176 = vpack.c.b16 %v906, %v900
      %v1177 = vpack.c.b16 %v907, %v901
      %v1178 = vpack.c.b16 %v908, %v902
      %v1179 = vpack.c.b16 %v915, %v909
      %v1180 = vpack.c.b16 %v916, %v910
      %v1181 = vpack.c.b16 %v917, %v911
      %v1182 = vpack.c.b16 %v918, %v912
      %v1183 = vpack.c.b16 %v919, %v913
      %v1184 = vpack.c.b16 %v920, %v914
      %v1185 = vpack.c.b16 %v927, %v921
      %v1186 = vpack.c.b16 %v928, %v922
      %v1187 = vpack.c.b16 %v929, %v923
      %v1188 = vpack.c.b16 %v930, %v924
      %v1189 = vpack.c.b16 %v931, %v925
      %v1190 = vpack.c.b16 %v932, %v926
      %v1191 = vpack.c.b16 %v939, %v933
      %v1192 = vpack.c.b16 %v940, %v934
      %v1193 = vpack.c.b16 %v941, %v935
      %v1194 = vpack.c.b16 %v942, %v936
      %v1195 = vpack.c.b16 %v943, %v937
      %v1196 = vpack.c.b16 %v944, %v938
      %v1197 = vpack.c.b16 %v951, %v945
      %v1198 = vpack.c.b16 %v952, %v946
      %v1199 = vpack.c.b16 %v953, %v947
      %v1200 = vpack.c.b16 %v954, %v948
      %v1201 = vpack.c.b16 %v955, %v949
      %v1202 = vpack.c.b16 %v956, %v950
      %v1203 = vpack.c.b16 %v963, %v957
      %v1204 = vpack.c.b16 %v964, %v958
      %v1205 = vpack.c.b16 %v965, %v959
      %v1206 = vpack.c.b16 %v966, %v960
      %v1207 = vpack.c.b16 %v967, %v961
      %v1208 = vpack.c.b16 %v968, %v962
      %v1209 = vpack.c.b16 %v975, %v969
      %v1210 = vpack.c.b16 %v976, %v970
      %v1211 = vpack.c.b16 %v977, %v971
      %v1212 = vpack.c.b16 %v978, %v972
      %v1213 = vpack.c.b16 %v979, %v973
      %v1214 = vpack.c.b16 %v980, %v974
      %v1215 = vpack.c.b16 %v987, %v981
      %v1216 = vpack.c.b16 %v988, %v982
      %v1217 = vpack.c.b16 %v989, %v983
      %v1218 = vpack.c.b16 %v990, %v984
      %v1219 = vpack.c.b16 %v991, %v985
      %v1220 = vpack.c.b16 %v992, %v986
      %v1221 = vpack.c.b16 %v999, %v993
      %v1222 = vpack.c.b16 %v1000, %v994
      %v1223 = vpack.c.b16 %v1001, %v995
      %v1224 = vpack.c.b16 %v1002, %v996
      %v1225 = vpack.c.b16 %v1003, %v997
      %v1226 = vpack.c.b16 %v1004, %v998
      %v1227 = vpack.c.b16 %v1011, %v1005
      %v1228 = vpack.c.b16 %v1012, %v1006
      %v1229 = vpack.c.b16 %v1013, %v1007
      %v1230 = vpack.c.b16 %v1014, %v1008
      %v1231 = vpack.c.b16 %v1015, %v1009
      %v1232 = vpack.c.b16 %v1016, %v1010
      %v1233 = vpack.c.b16 %v1023, %v1017
      %v1234 = vpack.c.b16 %v1024, %v1018
      %v1235 = vpack.c.b16 %v1025, %v1019
      %v1236 = vpack.c.b16 %v1026, %v1020
      %v1237 = vpack.c.b16 %v1027, %v1021
      %v1238 = vpack.c.b16 %v1028, %v1022
      %v1239 = vpack.c.b16 %v1035, %v1029
      %v1240 = vpack.c.b16 %v1036, %v1030
      %v1241 = vpack.c.b16 %v1037, %v1031
      %v1242 = vpack.c.b16 %v1038, %v1032
      %v1243 = vpack.c.b16 %v1039, %v1033
      %v1244 = vpack.c.b16 %v1040, %v1034
      %v1245 = vpack.c.b16 %v1047, %v1041
      %v1246 = vpack.c.b16 %v1048, %v1042
      %v1247 = vpack.c.b16 %v1049, %v1043
      %v1248 = vpack.c.b16 %v1050, %v1044
      %v1249 = vpack.c.b16 %v1051, %v1045
      %v1250 = vpack.c.b16 %v1052, %v1046
      %v1251 = vpack.c.b16 %v1059, %v1053
      %v1252 = vpack.c.b16 %v1060, %v1054
      %v1253 = vpack.c.b16 %v1061, %v1055
      %v1254 = vpack.c.b16 %v1062, %v1056
      %v1255 = vpack.c.b16 %v1063, %v1057
      %v1256 = vpack.c.b16 %v1064, %v1058
      %v1509 = vunpack.c.l.b16 %v397
      %v1510 = vunpack.c.l.b16 %v398
      %v1511 = vunpack.c.l.b16 %v399
      %v1512 = vunpack.c.l.b16 %v400
      %v1513 = vunpack.c.l.b16 %v401
      %v1514 = vunpack.c.l.b16 %v402
      %v1515 = vunpack.c.l.b16 %v403
      %v1516 = vunpack.c.l.b16 %v404
      %v1517 = vunpack.c.l.b16 %v405
      %v1518 = vunpack.c.l.b16 %v406
      %v1519 = vunpack.c.l.b16 %v407
      %v1520 = vunpack.c.l.b16 %v408
      %v1521 = vunpack.c.l.b16 %v409
      %v1522 = vunpack.c.l.b16 %v410
      %v1523 = vunpack.c.l.b16 %v411
      %v1524 = vunpack.c.l.b16 %v412
      %v1525 = vunpack.c.l.b16 %v413
      %v1526 = vunpack.c.l.b16 %v414
      %v1527 = vunpack.c.l.b16 %v415
      %v1528 = vunpack.c.l.b16 %v416
      %v1529 = vunpack.c.l.b16 %v417
      %v1530 = vunpack.c.l.b16 %v418
      %v1531 = vunpack.c.l.b16 %v419
      %v1532 = vunpack.c.l.b16 %v420
      %v1533 = vunpack.c.l.b16 %v421
      %v1534 = vunpack.c.l.b16 %v422
      %v1535 = vunpack.c.l.b16 %v423
      %v1536 = vunpack.c.l.b16 %v424
      %v1537 = vunpack.c.l.b16 %v425
      %v1538 = vunpack.c.l.b16 %v426
      %v1539 = vunpack.c.l.b16 %v427
      %v1540 = vunpack.c.l.b16 %v428
      %v1541 = vunpack.c.l.b16 %v429
      %v1542 = vunpack.c.l.b16 %v430
      %v1543 = vunpack.c.l.b16 %v431
      %v1544 = vunpack.c.l.b16 %v432
      %v1545 = vunpack.c.l.b16 %v433
      %v1546 = vunpack.c.l.b16 %v434
      %v1547 = vunpack.c.l.b16 %v435
      %v1548 = vunpack.c.l.b16 %v436
      %v1549 = vunpack.c.l.b16 %v437
      %v1550 = vunpack.c.l.b16 %v438
      %v1551 = vunpack.c.l.b16 %v439
      %v1552 = vunpack.c.l.b16 %v440
      %v1553 = vunpack.c.l.b16 %v441
      %v1554 = vunpack.c.l.b16 %v442
      %v1555 = vunpack.c.l.b16 %v443
      %v1556 = vunpack.c.l.b16 %v444
      %v1557 = vunpack.c.l.b16 %v445
      %v1558 = vunpack.c.l.b16 %v446
      %v1559 = vunpack.c.l.b16 %v447
      %v1560 = vunpack.c.l.b16 %v448
      %v1561 = vunpack.c.l.b16 %v449
      %v1562 = vunpack.c.l.b16 %v450
      %v1563 = vunpack.c.l.b16 %v451
      %v1564 = vunpack.c.l.b16 %v452
      %v1565 = vunpack.c.l.b16 %v453
      %v1566 = vunpack.c.l.b16 %v454
      %v1567 = vunpack.c.l.b16 %v455
      %v1568 = vunpack.c.l.b16 %v456
      %v1569 = vunpack.c.l.b16 %v457
      %v1570 = vunpack.c.l.b16 %v458
      %v1571 = vunpack.c.l.b16 %v459
      %v1572 = vunpack.c.l.b16 %v460
      %v1573 = vunpack.c.l.b16 %v461
      %v1574 = vunpack.c.l.b16 %v462
      %v1575 = vunpack.c.l.b16 %v463
      %v1576 = vunpack.c.l.b16 %v464
      %v1577 = vunpack.c.l.b16 %v465
      %v1578 = vunpack.c.l.b16 %v466
      %v1579 = vunpack.c.l.b16 %v467
      %v1580 = vunpack.c.l.b16 %v468
      %v1581 = vunpack.c.l.b16 %v469
      %v1582 = vunpack.c.l.b16 %v470
      %v1583 = vunpack.c.l.b16 %v471
      %v1584 = vunpack.c.l.b16 %v472
      %v1585 = vunpack.c.l.b16 %v473
      %v1586 = vunpack.c.l.b16 %v474
      %v1587 = vunpack.c.l.b16 %v475
      %v1588 = vunpack.c.l.b16 %v476
      %v1589 = vunpack.c.l.b16 %v477
      %v1590 = vunpack.c.l.b16 %v478
      %v1591 = vunpack.c.l.b16 %v479
      %v1592 = vunpack.c.l.b16 %v480
      %v1593 = vunpack.c.l.b16 %v481
      %v1594 = vunpack.c.l.b16 %v482
      %v1595 = vunpack.c.l.b16 %v483
      %v1596 = vunpack.c.l.b16 %v484
      %v1597 = vunpack.c.l.b16 %v485
      %v1598 = vunpack.c.l.b16 %v486
      %v1599 = vunpack.c.l.b16 %v487
      %v1600 = vunpack.c.l.b16 %v488
      %v1601 = vpack.c.b16 %v1510, %v1509
      %v1602 = vpack.c.b16 %v1512, %v1511
      %v1603 = vpack.c.b16 %v1514, %v1513
      %v1604 = vpack.c.b16 %v1516, %v1515
      %v1605 = vpack.c.b16 %v1518, %v1517
      %v1606 = vpack.c.b16 %v1520, %v1519
      %v1607 = vpack.c.b16 %v1522, %v1521
      %v1608 = vpack.c.b16 %v1524, %v1523
      %v1609 = vpack.c.b16 %v1526, %v1525
      %v1610 = vpack.c.b16 %v1528, %v1527
      %v1611 = vpack.c.b16 %v1530, %v1529
      %v1612 = vpack.c.b16 %v1532, %v1531
      %v1613 = vpack.c.b16 %v1534, %v1533
      %v1614 = vpack.c.b16 %v1536, %v1535
      %v1615 = vpack.c.b16 %v1538, %v1537
      %v1616 = vpack.c.b16 %v1540, %v1539
      %v1617 = vpack.c.b16 %v1542, %v1541
      %v1618 = vpack.c.b16 %v1544, %v1543
      %v1619 = vpack.c.b16 %v1546, %v1545
      %v1620 = vpack.c.b16 %v1548, %v1547
      %v1621 = vpack.c.b16 %v1550, %v1549
      %v1622 = vpack.c.b16 %v1552, %v1551
      %v1623 = vpack.c.b16 %v1554, %v1553
      %v1624 = vpack.c.b16 %v1556, %v1555
      %v1625 = vpack.c.b16 %v1558, %v1557
      %v1626 = vpack.c.b16 %v1560, %v1559
      %v1627 = vpack.c.b16 %v1562, %v1561
      %v1628 = vpack.c.b16 %v1564, %v1563
      %v1629 = vpack.c.b16 %v1566, %v1565
      %v1630 = vpack.c.b16 %v1568, %v1567
      %v1631 = vpack.c.b16 %v1570, %v1569
      %v1632 = vpack.c.b16 %v1572, %v1571
      %v1633 = vpack.c.b16 %v1574, %v1573
      %v1634 = vpack.c.b16 %v1576, %v1575
      %v1635 = vpack.c.b16 %v1578, %v1577
      %v1636 = vpack.c.b16 %v1580, %v1579
      %v1637 = vpack.c.b16 %v1582, %v1581
      %v1638 = vpack.c.b16 %v1584, %v1583
      %v1639 = vpack.c.b16 %v1586, %v1585
      %v1640 = vpack.c.b16 %v1588, %v1587
      %v1641 = vpack.c.b16 %v1590, %v1589
      %v1642 = vpack.c.b16 %v1592, %v1591
      %v1643 = vpack.c.b16 %v1594, %v1593
      %v1644 = vpack.c.b16 %v1596, %v1595
      %v1645 = vpack.c.b16 %v1598, %v1597
      %v1646 = vpack.c.b16 %v1600, %v1599
      %vm1692 = vcmask 777216
      %v1694 = vsel %vm1692, %v1070, 0
      %v1697 = vsel %vm1692, %v1076, 0
      %v1700 = vsel %vm1692, %v1082, 0
      %v1703 = vsel %vm1692, %v1088, 0
      %v1706 = vsel %vm1692, %v1094, 0
      %v1709 = vsel %vm1692, %v1100, 0
      %v1712 = vsel %vm1692, %v1106, 0
      %v1715 = vsel %vm1692, %v1112, 0
      %v1718 = vsel %vm1692, %v1118, 0
      %v1721 = vsel %vm1692, %v1124, 0
      %v1724 = vsel %vm1692, %v1130, 0
      %v1727 = vsel %vm1692, %v1136, 0
      %v1730 = vsel %vm1692, %v1142, 0
      %v1733 = vsel %vm1692, %v1148, 0
      %v1736 = vsel %vm1692, %v1154, 0
      %v1739 = vsel %vm1692, %v1160, 0
      %v1742 = vsel %vm1692, %v1166, 0
      %v1745 = vsel %vm1692, %v1172, 0
      %v1748 = vsel %vm1692, %v1178, 0
      %v1751 = vsel %vm1692, %v1184, 0
      %v1754 = vsel %vm1692, %v1190, 0
      %v1757 = vsel %vm1692, %v1196, 0
      %v1760 = vsel %vm1692, %v1202, 0
      %v1763 = vsel %vm1692, %v1208, 0
      %v1766 = vsel %vm1692, %v1214, 0
      %v1769 = vsel %vm1692, %v1220, 0
      %v1772 = vsel %vm1692, %v1226, 0
      %v1775 = vsel %vm1692, %v1232, 0
      %v1778 = vsel %vm1692, %v1238, 0
      %v1781 = vsel %vm1692, %v1244, 0
      %v1784 = vsel %vm1692, %v1250, 0
      %v1787 = vsel %vm1692, %v1256, 0
      %vm1789 = vcmask 1046528
      %vm1790 = vcmask 1047552
      %v1791 = vsel %vm1789, 4294967295, 65535
      %v1792 = vsel %vm1790, %v1791, 0
      %v1794 = vand.u32 %v1646, %v1792
      %1796 = vmatprep.subr.bf16.mxu0 0
      %1797 = vmatpush1.bf16.msra.mxu0 %v1601
      %1798 = vmatprep.subr.bf16.mxu0 0
      %1799 = vmatpush1.bf16.msra.mxu0 %v1602
      %1800 = vmatprep.subr.bf16.mxu0 0
      %1801 = vmatpush1.bf16.msra.mxu0 %v1603
      %1802 = vmatprep.subr.bf16.mxu0 0
      %1803 = vmatpush1.bf16.msra.mxu0 %v1604
      %1804 = vmatprep.subr.bf16.mxu0 0
      %1805 = vmatpush1.bf16.msra.mxu0 %v1605
      %1806 = vmatprep.subr.bf16.mxu0 0
      %1807 = vmatpush1.bf16.msra.mxu0 %v1606
      %1808 = vmatprep.subr.bf16.mxu0 0
      %1809 = vmatpush1.bf16.msra.mxu0 %v1607
      %1810 = vmatprep.subr.bf16.mxu0 0
      %1811 = vmatpush1.bf16.msra.mxu0 %v1608
      %1812 = vmatprep.subr.bf16.mxu0 0
      %1813 = vmatpush1.bf16.msra.mxu0 %v1609
      %1814 = vmatprep.subr.bf16.mxu0 0
      %1815 = vmatpush1.bf16.msra.mxu0 %v1610
      %1816 = vmatprep.subr.bf16.mxu0 0
      %1817 = vmatpush1.bf16.msra.mxu0 %v1611
      %1818 = vmatprep.subr.bf16.mxu0 0
      %1819 = vmatpush1.bf16.msra.mxu0 %v1612
      %1820 = vmatprep.subr.bf16.mxu0 0
      %1821 = vmatpush1.bf16.msra.mxu0 %v1613
      %1822 = vmatprep.subr.bf16.mxu0 0
      %1823 = vmatpush1.bf16.msra.mxu0 %v1614
      %1824 = vmatprep.subr.bf16.mxu0 0
      %1825 = vmatpush1.bf16.msra.mxu0 %v1615
      %1826 = vmatprep.subr.bf16.mxu0 0
      %1827 = vmatpush1.bf16.msra.mxu0 %v1616
      %1828 = vmatprep.mubr.bf16.mxu0 %v1066
      %1829 = vmatmul.mubr.bf16.gmra.mrb[0].mxu0 %v1065
      %v1830 = vpop.f32.mrb[0].mxu0
      %v1831 = vadd.f32 0.0, %v1830
      %v1832 = vpop.f32.mrb[0].mxu0
      %v1833 = vpop.f32.mrb[0].mxu0
      %v1834 = vadd.f32 0.0, %v1833
      %v1835 = vpop.f32.mrb[0].mxu0
      %1836 = vmatprep.mubr.bf16.mxu0 %v1072
      %1837 = vmatmul.mubr.bf16.gmra.mrb[0].mxu0 %v1071
      %v1838 = vpop.f32.mrb[0].mxu0
      %v1839 = vadd.f32 0.0, %v1838
      %v1840 = vpop.f32.mrb[0].mxu0
      %v1841 = vpop.f32.mrb[0].mxu0
      %v1842 = vadd.f32 0.0, %v1841
      %v1843 = vpop.f32.mrb[0].mxu0
      %1844 = vmatprep.mubr.bf16.mxu0 %v1078
      %1845 = vmatmul.mubr.bf16.gmra.mrb[0].mxu0 %v1077
      %v1846 = vpop.f32.mrb[0].mxu0
      %v1847 = vadd.f32 0.0, %v1846
      %v1848 = vpop.f32.mrb[0].mxu0
      %v1849 = vpop.f32.mrb[0].mxu0
      %v1850 = vadd.f32 0.0, %v1849
      %v1851 = vpop.f32.mrb[0].mxu0
      %1852 = vmatprep.mubr.bf16.mxu0 %v1084
      %1853 = vmatmul.mubr.bf16.gmra.mrb[0].mxu0 %v1083
      %v1854 = vpop.f32.mrb[0].mxu0
      %v1855 = vadd.f32 0.0, %v1854
      %v1856 = vpop.f32.mrb[0].mxu0
      %v1857 = vpop.f32.mrb[0].mxu0
      %v1858 = vadd.f32 0.0, %v1857
      %v1859 = vpop.f32.mrb[0].mxu0
      %1860 = vmatprep.mubr.bf16.mxu0 %v1090
      %1861 = vmatmul.mubr.bf16.gmra.mrb[0].mxu0 %v1089
      %v1862 = vpop.f32.mrb[0].mxu0
      %v1863 = vadd.f32 0.0, %v1862
      %v1864 = vpop.f32.mrb[0].mxu0
      %v1865 = vpop.f32.mrb[0].mxu0
      %v1866 = vadd.f32 0.0, %v1865
      %v1867 = vpop.f32.mrb[0].mxu0
      %1868 = vmatprep.mubr.bf16.mxu0 %v1096
      %1869 = vmatmul.mubr.bf16.gmra.mrb[0].mxu0 %v1095
      %v1870 = vpop.f32.mrb[0].mxu0
      %v1871 = vadd.f32 0.0, %v1870
      %v1872 = vpop.f32.mrb[0].mxu0
      %v1873 = vpop.f32.mrb[0].mxu0
      %v1874 = vadd.f32 0.0, %v1873
      %v1875 = vpop.f32.mrb[0].mxu0
      %1876 = vmatprep.mubr.bf16.mxu0 %v1102
      %1877 = vmatmul.mubr.bf16.gmra.mrb[0].mxu0 %v1101
      %v1878 = vpop.f32.mrb[0].mxu0
      %v1879 = vadd.f32 0.0, %v1878
      %v1880 = vpop.f32.mrb[0].mxu0
      %v1881 = vpop.f32.mrb[0].mxu0
      %v1882 = vadd.f32 0.0, %v1881
      %v1883 = vpop.f32.mrb[0].mxu0
      %1884 = vmatprep.mubr.bf16.mxu0 %v1108
      %1885 = vmatmul.mubr.bf16.gmra.mrb[0].mxu0 %v1107
      %v1886 = vpop.f32.mrb[0].mxu0
      %v1887 = vadd.f32 0.0, %v1886
      %v1888 = vpop.f32.mrb[0].mxu0
      %v1889 = vpop.f32.mrb[0].mxu0
      %v1890 = vadd.f32 0.0, %v1889
      %v1891 = vpop.f32.mrb[0].mxu0
      %1892 = vmatprep.mubr.bf16.mxu0 %v1114
      %1893 = vmatmul.mubr.bf16.gmra.mrb[0].mxu0 %v1113
      %v1894 = vpop.f32.mrb[0].mxu0
      %v1895 = vadd.f32 0.0, %v1894
      %v1896 = vpop.f32.mrb[0].mxu0
      %v1897 = vpop.f32.mrb[0].mxu0
      %v1898 = vadd.f32 0.0, %v1897
      %v1899 = vpop.f32.mrb[0].mxu0
      %1900 = vmatprep.mubr.bf16.mxu0 %v1120
      %1901 = vmatmul.mubr.bf16.gmra.mrb[0].mxu0 %v1119
      %v1902 = vpop.f32.mrb[0].mxu0
      %v1903 = vadd.f32 0.0, %v1902
      %v1904 = vpop.f32.mrb[0].mxu0
      %v1905 = vpop.f32.mrb[0].mxu0
      %v1906 = vadd.f32 0.0, %v1905
      %v1907 = vpop.f32.mrb[0].mxu0
      %1908 = vmatprep.mubr.bf16.mxu0 %v1126
      %1909 = vmatmul.mubr.bf16.gmra.mrb[0].mxu0 %v1125
      %v1910 = vpop.f32.mrb[0].mxu0
      %v1911 = vadd.f32 0.0, %v1910
      %v1912 = vpop.f32.mrb[0].mxu0
      %v1913 = vpop.f32.mrb[0].mxu0
      %v1914 = vadd.f32 0.0, %v1913
      %v1915 = vpop.f32.mrb[0].mxu0
      %1916 = vmatprep.mubr.bf16.mxu0 %v1132
      %1917 = vmatmul.mubr.bf16.gmra.mrb[0].mxu0 %v1131
      %v1918 = vpop.f32.mrb[0].mxu0
      %v1919 = vadd.f32 0.0, %v1918
      %v1920 = vpop.f32.mrb[0].mxu0
      %v1921 = vpop.f32.mrb[0].mxu0
      %v1922 = vadd.f32 0.0, %v1921
      %v1923 = vpop.f32.mrb[0].mxu0
      %1924 = vmatprep.mubr.bf16.mxu0 %v1138
      %1925 = vmatmul.mubr.bf16.gmra.mrb[0].mxu0 %v1137
      %v1926 = vpop.f32.mrb[0].mxu0
      %v1927 = vadd.f32 0.0, %v1926
      %v1928 = vpop.f32.mrb[0].mxu0
      %v1929 = vpop.f32.mrb[0].mxu0
      %v1930 = vadd.f32 0.0, %v1929
      %v1931 = vpop.f32.mrb[0].mxu0
      %1932 = vmatprep.mubr.bf16.mxu0 %v1144
      %1933 = vmatmul.mubr.bf16.gmra.mrb[0].mxu0 %v1143
      %v1934 = vpop.f32.mrb[0].mxu0
      %v1935 = vadd.f32 0.0, %v1934
      %v1936 = vpop.f32.mrb[0].mxu0
      %v1937 = vpop.f32.mrb[0].mxu0
      %v1938 = vadd.f32 0.0, %v1937
      %v1939 = vpop.f32.mrb[0].mxu0
      %1940 = vmatprep.mubr.bf16.mxu0 %v1150
      %1941 = vmatmul.mubr.bf16.gmra.mrb[0].mxu0 %v1149
      %v1942 = vpop.f32.mrb[0].mxu0
      %v1943 = vadd.f32 0.0, %v1942
      %v1944 = vpop.f32.mrb[0].mxu0
      %v1945 = vpop.f32.mrb[0].mxu0
      %v1946 = vadd.f32 0.0, %v1945
      %v1947 = vpop.f32.mrb[0].mxu0
      %1948 = vmatprep.mubr.bf16.mxu0 %v1156
      %1949 = vmatmul.mubr.bf16.gmra.mrb[0].mxu0 %v1155
      %v1950 = vpop.f32.mrb[0].mxu0
      %v1951 = vadd.f32 0.0, %v1950
      %v1952 = vpop.f32.mrb[0].mxu0
      %v1953 = vpop.f32.mrb[0].mxu0
      %v1954 = vadd.f32 0.0, %v1953
      %v1955 = vpop.f32.mrb[0].mxu0
      %1956 = vmatprep.mubr.bf16.mxu0 %v1162
      %1957 = vmatmul.mubr.bf16.gmra.mrb[0].mxu0 %v1161
      %v1958 = vpop.f32.mrb[0].mxu0
      %v1959 = vadd.f32 0.0, %v1958
      %v1960 = vpop.f32.mrb[0].mxu0
      %v1961 = vpop.f32.mrb[0].mxu0
      %v1962 = vadd.f32 0.0, %v1961
      %v1963 = vpop.f32.mrb[0].mxu0
      %1964 = vmatprep.mubr.bf16.mxu0 %v1168
      %1965 = vmatmul.mubr.bf16.gmra.mrb[0].mxu0 %v1167
      %v1966 = vpop.f32.mrb[0].mxu0
      %v1967 = vadd.f32 0.0, %v1966
      %v1968 = vpop.f32.mrb[0].mxu0
      %v1969 = vpop.f32.mrb[0].mxu0
      %v1970 = vadd.f32 0.0, %v1969
      %v1971 = vpop.f32.mrb[0].mxu0
      %1972 = vmatprep.mubr.bf16.mxu0 %v1174
      %1973 = vmatmul.mubr.bf16.gmra.mrb[0].mxu0 %v1173
      %v1974 = vpop.f32.mrb[0].mxu0
      %v1975 = vadd.f32 0.0, %v1974
      %v1976 = vpop.f32.mrb[0].mxu0
      %v1977 = vpop.f32.mrb[0].mxu0
      %v1978 = vadd.f32 0.0, %v1977
      %v1979 = vpop.f32.mrb[0].mxu0
      %1980 = vmatprep.mubr.bf16.mxu0 %v1180
      %1981 = vmatmul.mubr.bf16.gmra.mrb[0].mxu0 %v1179
      %v1982 = vpop.f32.mrb[0].mxu0
      %v1983 = vadd.f32 0.0, %v1982
      %v1984 = vpop.f32.mrb[0].mxu0
      %v1985 = vpop.f32.mrb[0].mxu0
      %v1986 = vadd.f32 0.0, %v1985
      %v1987 = vpop.f32.mrb[0].mxu0
      %1988 = vmatprep.mubr.bf16.mxu0 %v1186
      %1989 = vmatmul.mubr.bf16.gmra.mrb[0].mxu0 %v1185
      %v1990 = vpop.f32.mrb[0].mxu0
      %v1991 = vadd.f32 0.0, %v1990
      %v1992 = vpop.f32.mrb[0].mxu0
      %v1993 = vpop.f32.mrb[0].mxu0
      %v1994 = vadd.f32 0.0, %v1993
      %v1995 = vpop.f32.mrb[0].mxu0
      %1996 = vmatprep.mubr.bf16.mxu0 %v1192
      %1997 = vmatmul.mubr.bf16.gmra.mrb[0].mxu0 %v1191
      %v1998 = vpop.f32.mrb[0].mxu0
      %v1999 = vadd.f32 0.0, %v1998
      %v2000 = vpop.f32.mrb[0].mxu0
      %v2001 = vpop.f32.mrb[0].mxu0
      %v2002 = vadd.f32 0.0, %v2001
      %v2003 = vpop.f32.mrb[0].mxu0
      %2004 = vmatprep.mubr.bf16.mxu0 %v1198
      %2005 = vmatmul.mubr.bf16.gmra.mrb[0].mxu0 %v1197
      %v2006 = vpop.f32.mrb[0].mxu0
      %v2007 = vadd.f32 0.0, %v2006
      %v2008 = vpop.f32.mrb[0].mxu0
      %v2009 = vpop.f32.mrb[0].mxu0
      %v2010 = vadd.f32 0.0, %v2009
      %v2011 = vpop.f32.mrb[0].mxu0
      %2012 = vmatprep.mubr.bf16.mxu0 %v1204
      %2013 = vmatmul.mubr.bf16.gmra.mrb[0].mxu0 %v1203
      %v2014 = vpop.f32.mrb[0].mxu0
      %v2015 = vadd.f32 0.0, %v2014
      %v2016 = vpop.f32.mrb[0].mxu0
      %v2017 = vpop.f32.mrb[0].mxu0
      %v2018 = vadd.f32 0.0, %v2017
      %v2019 = vpop.f32.mrb[0].mxu0
      %2020 = vmatprep.mubr.bf16.mxu0 %v1210
      %2021 = vmatmul.mubr.bf16.gmra.mrb[0].mxu0 %v1209
      %v2022 = vpop.f32.mrb[0].mxu0
      %v2023 = vadd.f32 0.0, %v2022
      %v2024 = vpop.f32.mrb[0].mxu0
      %v2025 = vpop.f32.mrb[0].mxu0
      %v2026 = vadd.f32 0.0, %v2025
      %v2027 = vpop.f32.mrb[0].mxu0
      %2028 = vmatprep.mubr.bf16.mxu0 %v1216
      %2029 = vmatmul.mubr.bf16.gmra.mrb[0].mxu0 %v1215
      %v2030 = vpop.f32.mrb[0].mxu0
      %v2031 = vadd.f32 0.0, %v2030
      %v2032 = vpop.f32.mrb[0].mxu0
      %v2033 = vpop.f32.mrb[0].mxu0
      %v2034 = vadd.f32 0.0, %v2033
      %v2035 = vpop.f32.mrb[0].mxu0
      %2036 = vmatprep.mubr.bf16.mxu0 %v1222
      %2037 = vmatmul.mubr.bf16.gmra.mrb[0].mxu0 %v1221
      %v2038 = vpop.f32.mrb[0].mxu0
      %v2039 = vadd.f32 0.0, %v2038
      %v2040 = vpop.f32.mrb[0].mxu0
      %v2041 = vpop.f32.mrb[0].mxu0
      %v2042 = vadd.f32 0.0, %v2041
      %v2043 = vpop.f32.mrb[0].mxu0
      %2044 = vmatprep.mubr.bf16.mxu0 %v1228
      %2045 = vmatmul.mubr.bf16.gmra.mrb[0].mxu0 %v1227
      %v2046 = vpop.f32.mrb[0].mxu0
      %v2047 = vadd.f32 0.0, %v2046
      %v2048 = vpop.f32.mrb[0].mxu0
      %v2049 = vpop.f32.mrb[0].mxu0
      %v2050 = vadd.f32 0.0, %v2049
      %v2051 = vpop.f32.mrb[0].mxu0
      %2052 = vmatprep.mubr.bf16.mxu0 %v1234
      %2053 = vmatmul.mubr.bf16.gmra.mrb[0].mxu0 %v1233
      %v2054 = vpop.f32.mrb[0].mxu0
      %v2055 = vadd.f32 0.0, %v2054
      %v2056 = vpop.f32.mrb[0].mxu0
      %v2057 = vpop.f32.mrb[0].mxu0
      %v2058 = vadd.f32 0.0, %v2057
      %v2059 = vpop.f32.mrb[0].mxu0
      %2060 = vmatprep.mubr.bf16.mxu0 %v1240
      %2061 = vmatmul.mubr.bf16.gmra.mrb[0].mxu0 %v1239
      %v2062 = vpop.f32.mrb[0].mxu0
      %v2063 = vadd.f32 0.0, %v2062
      %v2064 = vpop.f32.mrb[0].mxu0
      %v2065 = vpop.f32.mrb[0].mxu0
      %v2066 = vadd.f32 0.0, %v2065
      %v2067 = vpop.f32.mrb[0].mxu0
      %2068 = vmatprep.mubr.bf16.mxu0 %v1246
      %2069 = vmatmul.mubr.bf16.gmra.mrb[0].mxu0 %v1245
      %v2070 = vpop.f32.mrb[0].mxu0
      %v2071 = vadd.f32 0.0, %v2070
      %v2072 = vpop.f32.mrb[0].mxu0
      %v2073 = vpop.f32.mrb[0].mxu0
      %v2074 = vadd.f32 0.0, %v2073
      %v2075 = vpop.f32.mrb[0].mxu0
      %2076 = vmatprep.mubr.bf16.mxu0 %v1252
      %2077 = vmatmul.mubr.bf16.gmra.mrb[0].mxu0 %v1251
      %v2078 = vpop.f32.mrb[0].mxu0
      %v2079 = vadd.f32 0.0, %v2078
      %v2080 = vpop.f32.mrb[0].mxu0
      %v2081 = vpop.f32.mrb[0].mxu0
      %v2082 = vadd.f32 0.0, %v2081
      %v2083 = vpop.f32.mrb[0].mxu0
      %2084 = vdwg.mxu0
      %2085 = vmatprep.subr.bf16.mxu0 0
      %2086 = vmatpush1.bf16.msra.mxu0 %v1617
      %2087 = vmatprep.subr.bf16.mxu0 0
      %2088 = vmatpush1.bf16.msra.mxu0 %v1618
      %2089 = vmatprep.subr.bf16.mxu0 0
      %2090 = vmatpush1.bf16.msra.mxu0 %v1619
      %2091 = vmatprep.subr.bf16.mxu0 0
      %2092 = vmatpush1.bf16.msra.mxu0 %v1620
      %2093 = vmatprep.subr.bf16.mxu0 0
      %2094 = vmatpush1.bf16.msra.mxu0 %v1621
      %2095 = vmatprep.subr.bf16.mxu0 0
      %2096 = vmatpush1.bf16.msra.mxu0 %v1622
      %2097 = vmatprep.subr.bf16.mxu0 0
      %2098 = vmatpush1.bf16.msra.mxu0 %v1623
      %2099 = vmatprep.subr.bf16.mxu0 0
      %2100 = vmatpush1.bf16.msra.mxu0 %v1624
      %2101 = vmatprep.subr.bf16.mxu0 0
      %2102 = vmatpush1.bf16.msra.mxu0 %v1625
      %2103 = vmatprep.subr.bf16.mxu0 0
      %2104 = vmatpush1.bf16.msra.mxu0 %v1626
      %2105 = vmatprep.subr.bf16.mxu0 0
      %2106 = vmatpush1.bf16.msra.mxu0 %v1627
      %2107 = vmatprep.subr.bf16.mxu0 0
      %2108 = vmatpush1.bf16.msra.mxu0 %v1628
      %2109 = vmatprep.subr.bf16.mxu0 0
      %2110 = vmatpush1.bf16.msra.mxu0 %v1629
      %2111 = vmatprep.subr.bf16.mxu0 0
      %2112 = vmatpush1.bf16.msra.mxu0 %v1630
      %2113 = vmatprep.subr.bf16.mxu0 0
      %2114 = vmatpush1.bf16.msra.mxu0 %v1631
      %2115 = vmatprep.subr.bf16.mxu0 0
      %2116 = vmatpush1.bf16.msra.mxu0 %v1632
      %2117 = vmatprep.mubr.bf16.mxu0 %v1068
      %2118 = vmatmul.mubr.bf16.gmra.mrb[0].mxu0 %v1067
      %v2119 = vpop.f32.mrb[0].mxu0
      %v2120 = vadd.f32 %v1831, %v2119
      %v2121 = vpop.f32.mrb[0].mxu0
      %v2122 = vpop.f32.mrb[0].mxu0
      %v2123 = vadd.f32 %v1834, %v2122
      %v2124 = vpop.f32.mrb[0].mxu0
      %2125 = vmatprep.mubr.bf16.mxu0 %v1074
      %2126 = vmatmul.mubr.bf16.gmra.mrb[0].mxu0 %v1073
      %v2127 = vpop.f32.mrb[0].mxu0
      %v2128 = vadd.f32 %v1839, %v2127
      %v2129 = vpop.f32.mrb[0].mxu0
      %v2130 = vpop.f32.mrb[0].mxu0
      %v2131 = vadd.f32 %v1842, %v2130
      %v2132 = vpop.f32.mrb[0].mxu0
      %2133 = vmatprep.mubr.bf16.mxu0 %v1080
      %2134 = vmatmul.mubr.bf16.gmra.mrb[0].mxu0 %v1079
      %v2135 = vpop.f32.mrb[0].mxu0
      %v2136 = vadd.f32 %v1847, %v2135
      %v2137 = vpop.f32.mrb[0].mxu0
      %v2138 = vpop.f32.mrb[0].mxu0
      %v2139 = vadd.f32 %v1850, %v2138
      %v2140 = vpop.f32.mrb[0].mxu0
      %2141 = vmatprep.mubr.bf16.mxu0 %v1086
      %2142 = vmatmul.mubr.bf16.gmra.mrb[0].mxu0 %v1085
      %v2143 = vpop.f32.mrb[0].mxu0
      %v2144 = vadd.f32 %v1855, %v2143
      %v2145 = vpop.f32.mrb[0].mxu0
      %v2146 = vpop.f32.mrb[0].mxu0
      %v2147 = vadd.f32 %v1858, %v2146
      %v2148 = vpop.f32.mrb[0].mxu0
      %2149 = vmatprep.mubr.bf16.mxu0 %v1092
      %2150 = vmatmul.mubr.bf16.gmra.mrb[0].mxu0 %v1091
      %v2151 = vpop.f32.mrb[0].mxu0
      %v2152 = vadd.f32 %v1863, %v2151
      %v2153 = vpop.f32.mrb[0].mxu0
      %v2154 = vpop.f32.mrb[0].mxu0
      %v2155 = vadd.f32 %v1866, %v2154
      %v2156 = vpop.f32.mrb[0].mxu0
      %2157 = vmatprep.mubr.bf16.mxu0 %v1098
      %2158 = vmatmul.mubr.bf16.gmra.mrb[0].mxu0 %v1097
      %v2159 = vpop.f32.mrb[0].mxu0
      %v2160 = vadd.f32 %v1871, %v2159
      %v2161 = vpop.f32.mrb[0].mxu0
      %v2162 = vpop.f32.mrb[0].mxu0
      %v2163 = vadd.f32 %v1874, %v2162
      %v2164 = vpop.f32.mrb[0].mxu0
      %2165 = vmatprep.mubr.bf16.mxu0 %v1104
      %2166 = vmatmul.mubr.bf16.gmra.mrb[0].mxu0 %v1103
      %v2167 = vpop.f32.mrb[0].mxu0
      %v2168 = vadd.f32 %v1879, %v2167
      %v2169 = vpop.f32.mrb[0].mxu0
      %v2170 = vpop.f32.mrb[0].mxu0
      %v2171 = vadd.f32 %v1882, %v2170
      %v2172 = vpop.f32.mrb[0].mxu0
      %2173 = vmatprep.mubr.bf16.mxu0 %v1110
      %2174 = vmatmul.mubr.bf16.gmra.mrb[0].mxu0 %v1109
      %v2175 = vpop.f32.mrb[0].mxu0
      %v2176 = vadd.f32 %v1887, %v2175
      %v2177 = vpop.f32.mrb[0].mxu0
      %v2178 = vpop.f32.mrb[0].mxu0
      %v2179 = vadd.f32 %v1890, %v2178
      %v2180 = vpop.f32.mrb[0].mxu0
      %2181 = vmatprep.mubr.bf16.mxu0 %v1116
      %2182 = vmatmul.mubr.bf16.gmra.mrb[0].mxu0 %v1115
      %v2183 = vpop.f32.mrb[0].mxu0
      %v2184 = vadd.f32 %v1895, %v2183
      %v2185 = vpop.f32.mrb[0].mxu0
      %v2186 = vpop.f32.mrb[0].mxu0
      %v2187 = vadd.f32 %v1898, %v2186
      %v2188 = vpop.f32.mrb[0].mxu0
      %2189 = vmatprep.mubr.bf16.mxu0 %v1122
      %2190 = vmatmul.mubr.bf16.gmra.mrb[0].mxu0 %v1121
      %v2191 = vpop.f32.mrb[0].mxu0
      %v2192 = vadd.f32 %v1903, %v2191
      %v2193 = vpop.f32.mrb[0].mxu0
      %v2194 = vpop.f32.mrb[0].mxu0
      %v2195 = vadd.f32 %v1906, %v2194
      %v2196 = vpop.f32.mrb[0].mxu0
      %2197 = vmatprep.mubr.bf16.mxu0 %v1128
      %2198 = vmatmul.mubr.bf16.gmra.mrb[0].mxu0 %v1127
      %v2199 = vpop.f32.mrb[0].mxu0
      %v2200 = vadd.f32 %v1911, %v2199
      %v2201 = vpop.f32.mrb[0].mxu0
      %v2202 = vpop.f32.mrb[0].mxu0
      %v2203 = vadd.f32 %v1914, %v2202
      %v2204 = vpop.f32.mrb[0].mxu0
      %2205 = vmatprep.mubr.bf16.mxu0 %v1134
      %2206 = vmatmul.mubr.bf16.gmra.mrb[0].mxu0 %v1133
      %v2207 = vpop.f32.mrb[0].mxu0
      %v2208 = vadd.f32 %v1919, %v2207
      %v2209 = vpop.f32.mrb[0].mxu0
      %v2210 = vpop.f32.mrb[0].mxu0
      %v2211 = vadd.f32 %v1922, %v2210
      %v2212 = vpop.f32.mrb[0].mxu0
      %2213 = vmatprep.mubr.bf16.mxu0 %v1140
      %2214 = vmatmul.mubr.bf16.gmra.mrb[0].mxu0 %v1139
      %v2215 = vpop.f32.mrb[0].mxu0
      %v2216 = vadd.f32 %v1927, %v2215
      %v2217 = vpop.f32.mrb[0].mxu0
      %v2218 = vpop.f32.mrb[0].mxu0
      %v2219 = vadd.f32 %v1930, %v2218
      %v2220 = vpop.f32.mrb[0].mxu0
      %2221 = vmatprep.mubr.bf16.mxu0 %v1146
      %2222 = vmatmul.mubr.bf16.gmra.mrb[0].mxu0 %v1145
      %v2223 = vpop.f32.mrb[0].mxu0
      %v2224 = vadd.f32 %v1935, %v2223
      %v2225 = vpop.f32.mrb[0].mxu0
      %v2226 = vpop.f32.mrb[0].mxu0
      %v2227 = vadd.f32 %v1938, %v2226
      %v2228 = vpop.f32.mrb[0].mxu0
      %2229 = vmatprep.mubr.bf16.mxu0 %v1152
      %2230 = vmatmul.mubr.bf16.gmra.mrb[0].mxu0 %v1151
      %v2231 = vpop.f32.mrb[0].mxu0
      %v2232 = vadd.f32 %v1943, %v2231
      %v2233 = vpop.f32.mrb[0].mxu0
      %v2234 = vpop.f32.mrb[0].mxu0
      %v2235 = vadd.f32 %v1946, %v2234
      %v2236 = vpop.f32.mrb[0].mxu0
      %2237 = vmatprep.mubr.bf16.mxu0 %v1158
      %2238 = vmatmul.mubr.bf16.gmra.mrb[0].mxu0 %v1157
      %v2239 = vpop.f32.mrb[0].mxu0
      %v2240 = vadd.f32 %v1951, %v2239
      %v2241 = vpop.f32.mrb[0].mxu0
      %v2242 = vpop.f32.mrb[0].mxu0
      %v2243 = vadd.f32 %v1954, %v2242
      %v2244 = vpop.f32.mrb[0].mxu0
      %2245 = vmatprep.mubr.bf16.mxu0 %v1164
      %2246 = vmatmul.mubr.bf16.gmra.mrb[0].mxu0 %v1163
      %v2247 = vpop.f32.mrb[0].mxu0
      %v2248 = vadd.f32 %v1959, %v2247
      %v2249 = vpop.f32.mrb[0].mxu0
      %v2250 = vpop.f32.mrb[0].mxu0
      %v2251 = vadd.f32 %v1962, %v2250
      %v2252 = vpop.f32.mrb[0].mxu0
      %2253 = vmatprep.mubr.bf16.mxu0 %v1170
      %2254 = vmatmul.mubr.bf16.gmra.mrb[0].mxu0 %v1169
      %v2255 = vpop.f32.mrb[0].mxu0
      %v2256 = vadd.f32 %v1967, %v2255
      %v2257 = vpop.f32.mrb[0].mxu0
      %v2258 = vpop.f32.mrb[0].mxu0
      %v2259 = vadd.f32 %v1970, %v2258
      %v2260 = vpop.f32.mrb[0].mxu0
      %2261 = vmatprep.mubr.bf16.mxu0 %v1176
      %2262 = vmatmul.mubr.bf16.gmra.mrb[0].mxu0 %v1175
      %v2263 = vpop.f32.mrb[0].mxu0
      %v2264 = vadd.f32 %v1975, %v2263
      %v2265 = vpop.f32.mrb[0].mxu0
      %v2266 = vpop.f32.mrb[0].mxu0
      %v2267 = vadd.f32 %v1978, %v2266
      %v2268 = vpop.f32.mrb[0].mxu0
      %2269 = vmatprep.mubr.bf16.mxu0 %v1182
      %2270 = vmatmul.mubr.bf16.gmra.mrb[0].mxu0 %v1181
      %v2271 = vpop.f32.mrb[0].mxu0
      %v2272 = vadd.f32 %v1983, %v2271
      %v2273 = vpop.f32.mrb[0].mxu0
      %v2274 = vpop.f32.mrb[0].mxu0
      %v2275 = vadd.f32 %v1986, %v2274
      %v2276 = vpop.f32.mrb[0].mxu0
      %2277 = vmatprep.mubr.bf16.mxu0 %v1188
      %2278 = vmatmul.mubr.bf16.gmra.mrb[0].mxu0 %v1187
      %v2279 = vpop.f32.mrb[0].mxu0
      %v2280 = vadd.f32 %v1991, %v2279
      %v2281 = vpop.f32.mrb[0].mxu0
      %v2282 = vpop.f32.mrb[0].mxu0
      %v2283 = vadd.f32 %v1994, %v2282
      %v2284 = vpop.f32.mrb[0].mxu0
      %2285 = vmatprep.mubr.bf16.mxu0 %v1194
      %2286 = vmatmul.mubr.bf16.gmra.mrb[0].mxu0 %v1193
      %v2287 = vpop.f32.mrb[0].mxu0
      %v2288 = vadd.f32 %v1999, %v2287
      %v2289 = vpop.f32.mrb[0].mxu0
      %v2290 = vpop.f32.mrb[0].mxu0
      %v2291 = vadd.f32 %v2002, %v2290
      %v2292 = vpop.f32.mrb[0].mxu0
      %2293 = vmatprep.mubr.bf16.mxu0 %v1200
      %2294 = vmatmul.mubr.bf16.gmra.mrb[0].mxu0 %v1199
      %v2295 = vpop.f32.mrb[0].mxu0
      %v2296 = vadd.f32 %v2007, %v2295
      %v2297 = vpop.f32.mrb[0].mxu0
      %v2298 = vpop.f32.mrb[0].mxu0
      %v2299 = vadd.f32 %v2010, %v2298
      %v2300 = vpop.f32.mrb[0].mxu0
      %2301 = vmatprep.mubr.bf16.mxu0 %v1206
      %2302 = vmatmul.mubr.bf16.gmra.mrb[0].mxu0 %v1205
      %v2303 = vpop.f32.mrb[0].mxu0
      %v2304 = vadd.f32 %v2015, %v2303
      %v2305 = vpop.f32.mrb[0].mxu0
      %v2306 = vpop.f32.mrb[0].mxu0
      %v2307 = vadd.f32 %v2018, %v2306
      %v2308 = vpop.f32.mrb[0].mxu0
      %2309 = vmatprep.mubr.bf16.mxu0 %v1212
      %2310 = vmatmul.mubr.bf16.gmra.mrb[0].mxu0 %v1211
      %v2311 = vpop.f32.mrb[0].mxu0
      %v2312 = vadd.f32 %v2023, %v2311
      %v2313 = vpop.f32.mrb[0].mxu0
      %v2314 = vpop.f32.mrb[0].mxu0
      %v2315 = vadd.f32 %v2026, %v2314
      %v2316 = vpop.f32.mrb[0].mxu0
      %2317 = vmatprep.mubr.bf16.mxu0 %v1218
      %2318 = vmatmul.mubr.bf16.gmra.mrb[0].mxu0 %v1217
      %v2319 = vpop.f32.mrb[0].mxu0
      %v2320 = vadd.f32 %v2031, %v2319
      %v2321 = vpop.f32.mrb[0].mxu0
      %v2322 = vpop.f32.mrb[0].mxu0
      %v2323 = vadd.f32 %v2034, %v2322
      %v2324 = vpop.f32.mrb[0].mxu0
      %2325 = vmatprep.mubr.bf16.mxu0 %v1224
      %2326 = vmatmul.mubr.bf16.gmra.mrb[0].mxu0 %v1223
      %v2327 = vpop.f32.mrb[0].mxu0
      %v2328 = vadd.f32 %v2039, %v2327
      %v2329 = vpop.f32.mrb[0].mxu0
      %v2330 = vpop.f32.mrb[0].mxu0
      %v2331 = vadd.f32 %v2042, %v2330
      %v2332 = vpop.f32.mrb[0].mxu0
      %2333 = vmatprep.mubr.bf16.mxu0 %v1230
      %2334 = vmatmul.mubr.bf16.gmra.mrb[0].mxu0 %v1229
      %v2335 = vpop.f32.mrb[0].mxu0
      %v2336 = vadd.f32 %v2047, %v2335
      %v2337 = vpop.f32.mrb[0].mxu0
      %v2338 = vpop.f32.mrb[0].mxu0
      %v2339 = vadd.f32 %v2050, %v2338
      %v2340 = vpop.f32.mrb[0].mxu0
      %2341 = vmatprep.mubr.bf16.mxu0 %v1236
      %2342 = vmatmul.mubr.bf16.gmra.mrb[0].mxu0 %v1235
      %v2343 = vpop.f32.mrb[0].mxu0
      %v2344 = vadd.f32 %v2055, %v2343
      %v2345 = vpop.f32.mrb[0].mxu0
      %v2346 = vpop.f32.mrb[0].mxu0
      %v2347 = vadd.f32 %v2058, %v2346
      %v2348 = vpop.f32.mrb[0].mxu0
      %2349 = vmatprep.mubr.bf16.mxu0 %v1242
      %2350 = vmatmul.mubr.bf16.gmra.mrb[0].mxu0 %v1241
      %v2351 = vpop.f32.mrb[0].mxu0
      %v2352 = vadd.f32 %v2063, %v2351
      %v2353 = vpop.f32.mrb[0].mxu0
      %v2354 = vpop.f32.mrb[0].mxu0
      %v2355 = vadd.f32 %v2066, %v2354
      %v2356 = vpop.f32.mrb[0].mxu0
      %2357 = vmatprep.mubr.bf16.mxu0 %v1248
      %2358 = vmatmul.mubr.bf16.gmra.mrb[0].mxu0 %v1247
      %v2359 = vpop.f32.mrb[0].mxu0
      %v2360 = vadd.f32 %v2071, %v2359
      %v2361 = vpop.f32.mrb[0].mxu0
      %v2362 = vpop.f32.mrb[0].mxu0
      %v2363 = vadd.f32 %v2074, %v2362
      %v2364 = vpop.f32.mrb[0].mxu0
      %2365 = vmatprep.mubr.bf16.mxu0 %v1254
      %2366 = vmatmul.mubr.bf16.gmra.mrb[0].mxu0 %v1253
      %v2367 = vpop.f32.mrb[0].mxu0
      %v2368 = vadd.f32 %v2079, %v2367
      %v2369 = vpop.f32.mrb[0].mxu0
      %v2370 = vpop.f32.mrb[0].mxu0
      %v2371 = vadd.f32 %v2082, %v2370
      %v2372 = vpop.f32.mrb[0].mxu0
      %2373 = vdwg.mxu0
      %2374 = vmatprep.subr.bf16.mxu0 0
      %2375 = vmatpush1.bf16.msra.mxu0 %v1633
      %2376 = vmatprep.subr.bf16.mxu0 0
      %2377 = vmatpush1.bf16.msra.mxu0 %v1634
      %2378 = vmatprep.subr.bf16.mxu0 0
      %2379 = vmatpush1.bf16.msra.mxu0 %v1635
      %2380 = vmatprep.subr.bf16.mxu0 0
      %2381 = vmatpush1.bf16.msra.mxu0 %v1636
      %2382 = vmatprep.subr.bf16.mxu0 0
      %2383 = vmatpush1.bf16.msra.mxu0 %v1637
      %2384 = vmatprep.subr.bf16.mxu0 0
      %2385 = vmatpush1.bf16.msra.mxu0 %v1638
      %2386 = vmatprep.subr.bf16.mxu0 0
      %2387 = vmatpush1.bf16.msra.mxu0 %v1639
      %2388 = vmatprep.subr.bf16.mxu0 0
      %2389 = vmatpush1.bf16.msra.mxu0 %v1640
      %2390 = vmatprep.subr.bf16.mxu0 0
      %2391 = vmatpush1.bf16.msra.mxu0 %v1641
      %2392 = vmatprep.subr.bf16.mxu0 0
      %2393 = vmatpush1.bf16.msra.mxu0 %v1642
      %2394 = vmatprep.subr.bf16.mxu0 0
      %2395 = vmatpush1.bf16.msra.mxu0 %v1643
      %2396 = vmatprep.subr.bf16.mxu0 0
      %2397 = vmatpush1.bf16.msra.mxu0 %v1644
      %2398 = vmatprep.subr.bf16.mxu0 0
      %2399 = vmatpush1.bf16.msra.mxu0 %v1645
      %2400 = vmatprep.subr.bf16.mxu0 0
      %2401 = vmatpush1.bf16.msra.mxu0 %v1794
      %2402 = vmatprep.subr.bf16.mxu0 0
      %2403 = vmatpush1.bf16.msra.mxu0 0
      %2404 = vmatprep.subr.bf16.mxu0 0
      %2405 = vmatpush1.bf16.msra.mxu0 0
      %2406 = vmatprep.mubr.bf16.mxu0 %v1694
      %2407 = vmatmul.mubr.bf16.gmra.mrb[0].mxu0 %v1069
      %v2408 = vpop.f32.mrb[0].mxu0
      %v2409 = vadd.f32 %v2120, %v2408
      %v2410 = vpop.f32.mrb[0].mxu0
      %v2411 = vpop.f32.mrb[0].mxu0
      %v2412 = vadd.f32 %v2123, %v2411
      %v2413 = vpop.f32.mrb[0].mxu0
      %2414 = vmatprep.mubr.bf16.mxu0 %v1697
      %2415 = vmatmul.mubr.bf16.gmra.mrb[0].mxu0 %v1075
      %v2416 = vpop.f32.mrb[0].mxu0
      %v2417 = vadd.f32 %v2128, %v2416
      %v2418 = vpop.f32.mrb[0].mxu0
      %v2419 = vpop.f32.mrb[0].mxu0
      %v2420 = vadd.f32 %v2131, %v2419
      %v2421 = vpop.f32.mrb[0].mxu0
      %2422 = vmatprep.mubr.bf16.mxu0 %v1700
      %2423 = vmatmul.mubr.bf16.gmra.mrb[0].mxu0 %v1081
      %v2424 = vpop.f32.mrb[0].mxu0
      %v2425 = vadd.f32 %v2136, %v2424
      %v2426 = vpop.f32.mrb[0].mxu0
      %v2427 = vpop.f32.mrb[0].mxu0
      %v2428 = vadd.f32 %v2139, %v2427
      %v2429 = vpop.f32.mrb[0].mxu0
      %2430 = vmatprep.mubr.bf16.mxu0 %v1703
      %2431 = vmatmul.mubr.bf16.gmra.mrb[0].mxu0 %v1087
      %v2432 = vpop.f32.mrb[0].mxu0
      %v2433 = vadd.f32 %v2144, %v2432
      %v2434 = vpop.f32.mrb[0].mxu0
      %v2435 = vpop.f32.mrb[0].mxu0
      %v2436 = vadd.f32 %v2147, %v2435
      %v2437 = vpop.f32.mrb[0].mxu0
      %2438 = vmatprep.mubr.bf16.mxu0 %v1706
      %2439 = vmatmul.mubr.bf16.gmra.mrb[0].mxu0 %v1093
      %v2440 = vpop.f32.mrb[0].mxu0
      %v2441 = vadd.f32 %v2152, %v2440
      %v2442 = vpop.f32.mrb[0].mxu0
      %v2443 = vpop.f32.mrb[0].mxu0
      %v2444 = vadd.f32 %v2155, %v2443
      %v2445 = vpop.f32.mrb[0].mxu0
      %2446 = vmatprep.mubr.bf16.mxu0 %v1709
      %2447 = vmatmul.mubr.bf16.gmra.mrb[0].mxu0 %v1099
      %v2448 = vpop.f32.mrb[0].mxu0
      %v2449 = vadd.f32 %v2160, %v2448
      %v2450 = vpop.f32.mrb[0].mxu0
      %v2451 = vpop.f32.mrb[0].mxu0
      %v2452 = vadd.f32 %v2163, %v2451
      %v2453 = vpop.f32.mrb[0].mxu0
      %2454 = vmatprep.mubr.bf16.mxu0 %v1712
      %2455 = vmatmul.mubr.bf16.gmra.mrb[0].mxu0 %v1105
      %v2456 = vpop.f32.mrb[0].mxu0
      %v2457 = vadd.f32 %v2168, %v2456
      %v2458 = vpop.f32.mrb[0].mxu0
      %v2459 = vpop.f32.mrb[0].mxu0
      %v2460 = vadd.f32 %v2171, %v2459
      %v2461 = vpop.f32.mrb[0].mxu0
      %2462 = vmatprep.mubr.bf16.mxu0 %v1715
      %2463 = vmatmul.mubr.bf16.gmra.mrb[0].mxu0 %v1111
      %v2464 = vpop.f32.mrb[0].mxu0
      %v2465 = vadd.f32 %v2176, %v2464
      %v2466 = vpop.f32.mrb[0].mxu0
      %v2467 = vpop.f32.mrb[0].mxu0
      %v2468 = vadd.f32 %v2179, %v2467
      %v2469 = vpop.f32.mrb[0].mxu0
      %2470 = vmatprep.mubr.bf16.mxu0 %v1718
      %2471 = vmatmul.mubr.bf16.gmra.mrb[0].mxu0 %v1117
      %v2472 = vpop.f32.mrb[0].mxu0
      %v2473 = vadd.f32 %v2184, %v2472
      %v2474 = vpop.f32.mrb[0].mxu0
      %v2475 = vpop.f32.mrb[0].mxu0
      %v2476 = vadd.f32 %v2187, %v2475
      %v2477 = vpop.f32.mrb[0].mxu0
      %2478 = vmatprep.mubr.bf16.mxu0 %v1721
      %2479 = vmatmul.mubr.bf16.gmra.mrb[0].mxu0 %v1123
      %v2480 = vpop.f32.mrb[0].mxu0
      %v2481 = vadd.f32 %v2192, %v2480
      %v2482 = vpop.f32.mrb[0].mxu0
      %v2483 = vpop.f32.mrb[0].mxu0
      %v2484 = vadd.f32 %v2195, %v2483
      %v2485 = vpop.f32.mrb[0].mxu0
      %2486 = vmatprep.mubr.bf16.mxu0 %v1724
      %2487 = vmatmul.mubr.bf16.gmra.mrb[0].mxu0 %v1129
      %v2488 = vpop.f32.mrb[0].mxu0
      %v2489 = vadd.f32 %v2200, %v2488
      %v2490 = vpop.f32.mrb[0].mxu0
      %v2491 = vpop.f32.mrb[0].mxu0
      %v2492 = vadd.f32 %v2203, %v2491
      %v2493 = vpop.f32.mrb[0].mxu0
      %2494 = vmatprep.mubr.bf16.mxu0 %v1727
      %2495 = vmatmul.mubr.bf16.gmra.mrb[0].mxu0 %v1135
      %v2496 = vpop.f32.mrb[0].mxu0
      %v2497 = vadd.f32 %v2208, %v2496
      %v2498 = vpop.f32.mrb[0].mxu0
      %v2499 = vpop.f32.mrb[0].mxu0
      %v2500 = vadd.f32 %v2211, %v2499
      %v2501 = vpop.f32.mrb[0].mxu0
      %2502 = vmatprep.mubr.bf16.mxu0 %v1730
      %2503 = vmatmul.mubr.bf16.gmra.mrb[0].mxu0 %v1141
      %v2504 = vpop.f32.mrb[0].mxu0
      %v2505 = vadd.f32 %v2216, %v2504
      %v2506 = vpop.f32.mrb[0].mxu0
      %v2507 = vpop.f32.mrb[0].mxu0
      %v2508 = vadd.f32 %v2219, %v2507
      %v2509 = vpop.f32.mrb[0].mxu0
      %2510 = vmatprep.mubr.bf16.mxu0 %v1733
      %2511 = vmatmul.mubr.bf16.gmra.mrb[0].mxu0 %v1147
      %v2512 = vpop.f32.mrb[0].mxu0
      %v2513 = vadd.f32 %v2224, %v2512
      %v2514 = vpop.f32.mrb[0].mxu0
      %v2515 = vpop.f32.mrb[0].mxu0
      %v2516 = vadd.f32 %v2227, %v2515
      %v2517 = vpop.f32.mrb[0].mxu0
      %2518 = vmatprep.mubr.bf16.mxu0 %v1736
      %2519 = vmatmul.mubr.bf16.gmra.mrb[0].mxu0 %v1153
      %v2520 = vpop.f32.mrb[0].mxu0
      %v2521 = vadd.f32 %v2232, %v2520
      %v2522 = vpop.f32.mrb[0].mxu0
      %v2523 = vpop.f32.mrb[0].mxu0
      %v2524 = vadd.f32 %v2235, %v2523
      %v2525 = vpop.f32.mrb[0].mxu0
      %2526 = vmatprep.mubr.bf16.mxu0 %v1739
      %2527 = vmatmul.mubr.bf16.gmra.mrb[0].mxu0 %v1159
      %v2528 = vpop.f32.mrb[0].mxu0
      %v2529 = vadd.f32 %v2240, %v2528
      %v2530 = vpop.f32.mrb[0].mxu0
      %v2531 = vpop.f32.mrb[0].mxu0
      %v2532 = vadd.f32 %v2243, %v2531
      %v2533 = vpop.f32.mrb[0].mxu0
      %2534 = vmatprep.mubr.bf16.mxu0 %v1742
      %2535 = vmatmul.mubr.bf16.gmra.mrb[0].mxu0 %v1165
      %v2536 = vpop.f32.mrb[0].mxu0
      %v2537 = vadd.f32 %v2248, %v2536
      %v2538 = vpop.f32.mrb[0].mxu0
      %v2539 = vpop.f32.mrb[0].mxu0
      %v2540 = vadd.f32 %v2251, %v2539
      %v2541 = vpop.f32.mrb[0].mxu0
      %2542 = vmatprep.mubr.bf16.mxu0 %v1745
      %2543 = vmatmul.mubr.bf16.gmra.mrb[0].mxu0 %v1171
      %v2544 = vpop.f32.mrb[0].mxu0
      %v2545 = vadd.f32 %v2256, %v2544
      %v2546 = vpop.f32.mrb[0].mxu0
      %v2547 = vpop.f32.mrb[0].mxu0
      %v2548 = vadd.f32 %v2259, %v2547
      %v2549 = vpop.f32.mrb[0].mxu0
      %2550 = vmatprep.mubr.bf16.mxu0 %v1748
      %2551 = vmatmul.mubr.bf16.gmra.mrb[0].mxu0 %v1177
      %v2552 = vpop.f32.mrb[0].mxu0
      %v2553 = vadd.f32 %v2264, %v2552
      %v2554 = vpop.f32.mrb[0].mxu0
      %v2555 = vpop.f32.mrb[0].mxu0
      %v2556 = vadd.f32 %v2267, %v2555
      %v2557 = vpop.f32.mrb[0].mxu0
      %2558 = vmatprep.mubr.bf16.mxu0 %v1751
      %2559 = vmatmul.mubr.bf16.gmra.mrb[0].mxu0 %v1183
      %v2560 = vpop.f32.mrb[0].mxu0
      %v2561 = vadd.f32 %v2272, %v2560
      %v2562 = vpop.f32.mrb[0].mxu0
      %v2563 = vpop.f32.mrb[0].mxu0
      %v2564 = vadd.f32 %v2275, %v2563
      %v2565 = vpop.f32.mrb[0].mxu0
      %2566 = vmatprep.mubr.bf16.mxu0 %v1754
      %2567 = vmatmul.mubr.bf16.gmra.mrb[0].mxu0 %v1189
      %v2568 = vpop.f32.mrb[0].mxu0
      %v2569 = vadd.f32 %v2280, %v2568
      %v2570 = vpop.f32.mrb[0].mxu0
      %v2571 = vpop.f32.mrb[0].mxu0
      %v2572 = vadd.f32 %v2283, %v2571
      %v2573 = vpop.f32.mrb[0].mxu0
      %2574 = vmatprep.mubr.bf16.mxu0 %v1757
      %2575 = vmatmul.mubr.bf16.gmra.mrb[0].mxu0 %v1195
      %v2576 = vpop.f32.mrb[0].mxu0
      %v2577 = vadd.f32 %v2288, %v2576
      %v2578 = vpop.f32.mrb[0].mxu0
      %v2579 = vpop.f32.mrb[0].mxu0
      %v2580 = vadd.f32 %v2291, %v2579
      %v2581 = vpop.f32.mrb[0].mxu0
      %2582 = vmatprep.mubr.bf16.mxu0 %v1760
      %2583 = vmatmul.mubr.bf16.gmra.mrb[0].mxu0 %v1201
      %v2584 = vpop.f32.mrb[0].mxu0
      %v2585 = vadd.f32 %v2296, %v2584
      %v2586 = vpop.f32.mrb[0].mxu0
      %v2587 = vpop.f32.mrb[0].mxu0
      %v2588 = vadd.f32 %v2299, %v2587
      %v2589 = vpop.f32.mrb[0].mxu0
      %2590 = vmatprep.mubr.bf16.mxu0 %v1763
      %2591 = vmatmul.mubr.bf16.gmra.mrb[0].mxu0 %v1207
      %v2592 = vpop.f32.mrb[0].mxu0
      %v2593 = vadd.f32 %v2304, %v2592
      %v2594 = vpop.f32.mrb[0].mxu0
      %v2595 = vpop.f32.mrb[0].mxu0
      %v2596 = vadd.f32 %v2307, %v2595
      %v2597 = vpop.f32.mrb[0].mxu0
      %2598 = vmatprep.mubr.bf16.mxu0 %v1766
      %2599 = vmatmul.mubr.bf16.gmra.mrb[0].mxu0 %v1213
      %v2600 = vpop.f32.mrb[0].mxu0
      %v2601 = vadd.f32 %v2312, %v2600
      %v2602 = vpop.f32.mrb[0].mxu0
      %v2603 = vpop.f32.mrb[0].mxu0
      %v2604 = vadd.f32 %v2315, %v2603
      %v2605 = vpop.f32.mrb[0].mxu0
      %2606 = vmatprep.mubr.bf16.mxu0 %v1769
      %2607 = vmatmul.mubr.bf16.gmra.mrb[0].mxu0 %v1219
      %v2608 = vpop.f32.mrb[0].mxu0
      %v2609 = vadd.f32 %v2320, %v2608
      %v2610 = vpop.f32.mrb[0].mxu0
      %v2611 = vpop.f32.mrb[0].mxu0
      %v2612 = vadd.f32 %v2323, %v2611
      %v2613 = vpop.f32.mrb[0].mxu0
      %2614 = vmatprep.mubr.bf16.mxu0 %v1772
      %2615 = vmatmul.mubr.bf16.gmra.mrb[0].mxu0 %v1225
      %v2616 = vpop.f32.mrb[0].mxu0
      %v2617 = vadd.f32 %v2328, %v2616
      %v2618 = vpop.f32.mrb[0].mxu0
      %v2619 = vpop.f32.mrb[0].mxu0
      %v2620 = vadd.f32 %v2331, %v2619
      %v2621 = vpop.f32.mrb[0].mxu0
      %2622 = vmatprep.mubr.bf16.mxu0 %v1775
      %2623 = vmatmul.mubr.bf16.gmra.mrb[0].mxu0 %v1231
      %v2624 = vpop.f32.mrb[0].mxu0
      %v2625 = vadd.f32 %v2336, %v2624
      %v2626 = vpop.f32.mrb[0].mxu0
      %v2627 = vpop.f32.mrb[0].mxu0
      %v2628 = vadd.f32 %v2339, %v2627
      %v2629 = vpop.f32.mrb[0].mxu0
      %2630 = vmatprep.mubr.bf16.mxu0 %v1778
      %2631 = vmatmul.mubr.bf16.gmra.mrb[0].mxu0 %v1237
      %v2632 = vpop.f32.mrb[0].mxu0
      %v2633 = vadd.f32 %v2344, %v2632
      %v2634 = vpop.f32.mrb[0].mxu0
      %v2635 = vpop.f32.mrb[0].mxu0
      %v2636 = vadd.f32 %v2347, %v2635
      %v2637 = vpop.f32.mrb[0].mxu0
      %2638 = vmatprep.mubr.bf16.mxu0 %v1781
      %2639 = vmatmul.mubr.bf16.gmra.mrb[0].mxu0 %v1243
      %v2640 = vpop.f32.mrb[0].mxu0
      %v2641 = vadd.f32 %v2352, %v2640
      %v2642 = vpop.f32.mrb[0].mxu0
      %v2643 = vpop.f32.mrb[0].mxu0
      %v2644 = vadd.f32 %v2355, %v2643
      %v2645 = vpop.f32.mrb[0].mxu0
      %2646 = vmatprep.mubr.bf16.mxu0 %v1784
      %2647 = vmatmul.mubr.bf16.gmra.mrb[0].mxu0 %v1249
      %v2648 = vpop.f32.mrb[0].mxu0
      %v2649 = vadd.f32 %v2360, %v2648
      %v2650 = vpop.f32.mrb[0].mxu0
      %v2651 = vpop.f32.mrb[0].mxu0
      %v2652 = vadd.f32 %v2363, %v2651
      %v2653 = vpop.f32.mrb[0].mxu0
      %2654 = vmatprep.mubr.bf16.mxu0 %v1787
      %2655 = vmatmul.mubr.bf16.gmra.mrb[0].mxu0 %v1255
      %v2656 = vpop.f32.mrb[0].mxu0
      %v2657 = vadd.f32 %v2368, %v2656
      %v2658 = vpop.f32.mrb[0].mxu0
      %v2659 = vpop.f32.mrb[0].mxu0
      %v2660 = vadd.f32 %v2371, %v2659
      %v2661 = vpop.f32.mrb[0].mxu0
      %2662 = vdwg.mxu0
      %v2663 = vld [vmem:[%s2] sm:$0x1]
      %v2665 = vlaneseq
      %v2666 = vshrl.u32 %v2665, 7
      %v2667 = vsub.s32 0, %v2666
      %v2668 = vrot.slane %v2663, %v2667
      %v2670 = vmul.f32 %v2409, %v2668
      %v2671 = vmul.f32 %v2412, %v2668
      %v2672 = vmul.f32 %v2417, %v2668
      %v2673 = vmul.f32 %v2420, %v2668
      %v2674 = vmul.f32 %v2425, %v2668
      %v2675 = vmul.f32 %v2428, %v2668
      %v2676 = vmul.f32 %v2433, %v2668
      %v2677 = vmul.f32 %v2436, %v2668
      %v2678 = vmul.f32 %v2441, %v2668
      %v2679 = vmul.f32 %v2444, %v2668
      %v2680 = vmul.f32 %v2449, %v2668
      %v2681 = vmul.f32 %v2452, %v2668
      %v2682 = vmul.f32 %v2457, %v2668
      %v2683 = vmul.f32 %v2460, %v2668
      %v2684 = vmul.f32 %v2465, %v2668
      %v2685 = vmul.f32 %v2468, %v2668
      %v2686 = vmul.f32 %v2473, %v2668
      %v2687 = vmul.f32 %v2476, %v2668
      %v2688 = vmul.f32 %v2481, %v2668
      %v2689 = vmul.f32 %v2484, %v2668
      %v2690 = vmul.f32 %v2489, %v2668
      %v2691 = vmul.f32 %v2492, %v2668
      %v2692 = vmul.f32 %v2497, %v2668
      %v2693 = vmul.f32 %v2500, %v2668
      %v2694 = vmul.f32 %v2505, %v2668
      %v2695 = vmul.f32 %v2508, %v2668
      %v2696 = vmul.f32 %v2513, %v2668
      %v2697 = vmul.f32 %v2516, %v2668
      %v2698 = vmul.f32 %v2521, %v2668
      %v2699 = vmul.f32 %v2524, %v2668
      %v2700 = vmul.f32 %v2529, %v2668
      %v2701 = vmul.f32 %v2532, %v2668
      %v2702 = vmul.f32 %v2537, %v2668
      %v2703 = vmul.f32 %v2540, %v2668
      %v2704 = vmul.f32 %v2545, %v2668
      %v2705 = vmul.f32 %v2548, %v2668
      %v2706 = vmul.f32 %v2553, %v2668
      %v2707 = vmul.f32 %v2556, %v2668
      %v2708 = vmul.f32 %v2561, %v2668
      %v2709 = vmul.f32 %v2564, %v2668
      %v2710 = vmul.f32 %v2569, %v2668
      %v2711 = vmul.f32 %v2572, %v2668
      %v2712 = vmul.f32 %v2577, %v2668
      %v2713 = vmul.f32 %v2580, %v2668
      %v2714 = vmul.f32 %v2585, %v2668
      %v2715 = vmul.f32 %v2588, %v2668
      %v2716 = vmul.f32 %v2593, %v2668
      %v2717 = vmul.f32 %v2596, %v2668
      %v2718 = vmul.f32 %v2601, %v2668
      %v2719 = vmul.f32 %v2604, %v2668
      %v2720 = vmul.f32 %v2609, %v2668
      %v2721 = vmul.f32 %v2612, %v2668
      %v2722 = vmul.f32 %v2617, %v2668
      %v2723 = vmul.f32 %v2620, %v2668
      %v2724 = vmul.f32 %v2625, %v2668
      %v2725 = vmul.f32 %v2628, %v2668
      %v2726 = vmul.f32 %v2633, %v2668
      %v2727 = vmul.f32 %v2636, %v2668
      %v2728 = vmul.f32 %v2641, %v2668
      %v2729 = vmul.f32 %v2644, %v2668
      %v2730 = vmul.f32 %v2649, %v2668
      %v2731 = vmul.f32 %v2652, %v2668
      %v2732 = vmul.f32 %v2657, %v2668
      %v2733 = vmul.f32 %v2660, %v2668
      %v2734 = vld [vmem:[%s3] sm:$0x1]
      %v2736 = vlaneseq
      %v2737 = vshrl.u32 %v2736, 7
      %v2738 = vsub.s32 0, %v2737
      %v2739 = vrot.slane %v2734, %v2738
      %v2741 = vadd.f32 %v2670, %v2739
      %v2742 = vadd.f32 %v2671, %v2739
      %v2743 = vadd.f32 %v2672, %v2739
      %v2744 = vadd.f32 %v2673, %v2739
      %v2745 = vadd.f32 %v2674, %v2739
      %v2746 = vadd.f32 %v2675, %v2739
      %v2747 = vadd.f32 %v2676, %v2739
      %v2748 = vadd.f32 %v2677, %v2739
      %v2749 = vadd.f32 %v2678, %v2739
      %v2750 = vadd.f32 %v2679, %v2739
      %v2751 = vadd.f32 %v2680, %v2739
      %v2752 = vadd.f32 %v2681, %v2739
      %v2753 = vadd.f32 %v2682, %v2739
      %v2754 = vadd.f32 %v2683, %v2739
      %v2755 = vadd.f32 %v2684, %v2739
      %v2756 = vadd.f32 %v2685, %v2739
      %v2757 = vadd.f32 %v2686, %v2739
      %v2758 = vadd.f32 %v2687, %v2739
      %v2759 = vadd.f32 %v2688, %v2739
      %v2760 = vadd.f32 %v2689, %v2739
      %v2761 = vadd.f32 %v2690, %v2739
      %v2762 = vadd.f32 %v2691, %v2739
      %v2763 = vadd.f32 %v2692, %v2739
      %v2764 = vadd.f32 %v2693, %v2739
      %v2765 = vadd.f32 %v2694, %v2739
      %v2766 = vadd.f32 %v2695, %v2739
      %v2767 = vadd.f32 %v2696, %v2739
      %v2768 = vadd.f32 %v2697, %v2739
      %v2769 = vadd.f32 %v2698, %v2739
      %v2770 = vadd.f32 %v2699, %v2739
      %v2771 = vadd.f32 %v2700, %v2739
      %v2772 = vadd.f32 %v2701, %v2739
      %v2773 = vadd.f32 %v2702, %v2739
      %v2774 = vadd.f32 %v2703, %v2739
      %v2775 = vadd.f32 %v2704, %v2739
      %v2776 = vadd.f32 %v2705, %v2739
      %v2777 = vadd.f32 %v2706, %v2739
      %v2778 = vadd.f32 %v2707, %v2739
      %v2779 = vadd.f32 %v2708, %v2739
      %v2780 = vadd.f32 %v2709, %v2739
      %v2781 = vadd.f32 %v2710, %v2739
      %v2782 = vadd.f32 %v2711, %v2739
      %v2783 = vadd.f32 %v2712, %v2739
      %v2784 = vadd.f32 %v2713, %v2739
      %v2785 = vadd.f32 %v2714, %v2739
      %v2786 = vadd.f32 %v2715, %v2739
      %v2787 = vadd.f32 %v2716, %v2739
      %v2788 = vadd.f32 %v2717, %v2739
      %v2789 = vadd.f32 %v2718, %v2739
      %v2790 = vadd.f32 %v2719, %v2739
      %v2791 = vadd.f32 %v2720, %v2739
      %v2792 = vadd.f32 %v2721, %v2739
      %v2793 = vadd.f32 %v2722, %v2739
      %v2794 = vadd.f32 %v2723, %v2739
      %v2795 = vadd.f32 %v2724, %v2739
      %v2796 = vadd.f32 %v2725, %v2739
      %v2797 = vadd.f32 %v2726, %v2739
      %v2798 = vadd.f32 %v2727, %v2739
      %v2799 = vadd.f32 %v2728, %v2739
      %v2800 = vadd.f32 %v2729, %v2739
      %v2801 = vadd.f32 %v2730, %v2739
      %v2802 = vadd.f32 %v2731, %v2739
      %v2803 = vadd.f32 %v2732, %v2739
      %v2804 = vadd.f32 %v2733, %v2739
      %v2805 = vmax.f32 %v2741, 0.0
      %v2806 = vmax.f32 %v2742, 0.0
      %v2807 = vmax.f32 %v2743, 0.0
      %v2808 = vmax.f32 %v2744, 0.0
      %v2809 = vmax.f32 %v2745, 0.0
      %v2810 = vmax.f32 %v2746, 0.0
      %v2811 = vmax.f32 %v2747, 0.0
      %v2812 = vmax.f32 %v2748, 0.0
      %v2813 = vmax.f32 %v2749, 0.0
      %v2814 = vmax.f32 %v2750, 0.0
      %v2815 = vmax.f32 %v2751, 0.0
      %v2816 = vmax.f32 %v2752, 0.0
      %v2817 = vmax.f32 %v2753, 0.0
      %v2818 = vmax.f32 %v2754, 0.0
      %v2819 = vmax.f32 %v2755, 0.0
      %v2820 = vmax.f32 %v2756, 0.0
      %v2821 = vmax.f32 %v2757, 0.0
      %v2822 = vmax.f32 %v2758, 0.0
      %v2823 = vmax.f32 %v2759, 0.0
      %v2824 = vmax.f32 %v2760, 0.0
      %v2825 = vmax.f32 %v2761, 0.0
      %v2826 = vmax.f32 %v2762, 0.0
      %v2827 = vmax.f32 %v2763, 0.0
      %v2828 = vmax.f32 %v2764, 0.0
      %v2829 = vmax.f32 %v2765, 0.0
      %v2830 = vmax.f32 %v2766, 0.0
      %v2831 = vmax.f32 %v2767, 0.0
      %v2832 = vmax.f32 %v2768, 0.0
      %v2833 = vmax.f32 %v2769, 0.0
      %v2834 = vmax.f32 %v2770, 0.0
      %v2835 = vmax.f32 %v2771, 0.0
      %v2836 = vmax.f32 %v2772, 0.0
      %v2837 = vmax.f32 %v2773, 0.0
      %v2838 = vmax.f32 %v2774, 0.0
      %v2839 = vmax.f32 %v2775, 0.0
      %v2840 = vmax.f32 %v2776, 0.0
      %v2841 = vmax.f32 %v2777, 0.0
      %v2842 = vmax.f32 %v2778, 0.0
      %v2843 = vmax.f32 %v2779, 0.0
      %v2844 = vmax.f32 %v2780, 0.0
      %v2845 = vmax.f32 %v2781, 0.0
      %v2846 = vmax.f32 %v2782, 0.0
      %v2847 = vmax.f32 %v2783, 0.0
      %v2848 = vmax.f32 %v2784, 0.0
      %v2849 = vmax.f32 %v2785, 0.0
      %v2850 = vmax.f32 %v2786, 0.0
      %v2851 = vmax.f32 %v2787, 0.0
      %v2852 = vmax.f32 %v2788, 0.0
      %v2853 = vmax.f32 %v2789, 0.0
      %v2854 = vmax.f32 %v2790, 0.0
      %v2855 = vmax.f32 %v2791, 0.0
      %v2856 = vmax.f32 %v2792, 0.0
      %v2857 = vmax.f32 %v2793, 0.0
      %v2858 = vmax.f32 %v2794, 0.0
      %v2859 = vmax.f32 %v2795, 0.0
      %v2860 = vmax.f32 %v2796, 0.0
      %v2861 = vmax.f32 %v2797, 0.0
      %v2862 = vmax.f32 %v2798, 0.0
      %v2863 = vmax.f32 %v2799, 0.0
      %v2864 = vmax.f32 %v2800, 0.0
      %v2865 = vmax.f32 %v2801, 0.0
      %v2866 = vmax.f32 %v2802, 0.0
      %v2867 = vmax.f32 %v2803, 0.0
      %v2868 = vmax.f32 %v2804, 0.0
      %v2869 = vpack.c.bf16 %v2806, %v2805
      %v2870 = vpack.c.bf16 %v2808, %v2807
      %v2871 = vpack.c.bf16 %v2810, %v2809
      %v2872 = vpack.c.bf16 %v2812, %v2811
      %v2873 = vpack.c.bf16 %v2814, %v2813
      %v2874 = vpack.c.bf16 %v2816, %v2815
      %v2875 = vpack.c.bf16 %v2818, %v2817
      %v2876 = vpack.c.bf16 %v2820, %v2819
      %v2877 = vpack.c.bf16 %v2822, %v2821
      %v2878 = vpack.c.bf16 %v2824, %v2823
      %v2879 = vpack.c.bf16 %v2826, %v2825
      %v2880 = vpack.c.bf16 %v2828, %v2827
      %v2881 = vpack.c.bf16 %v2830, %v2829
      %v2882 = vpack.c.bf16 %v2832, %v2831
      %v2883 = vpack.c.bf16 %v2834, %v2833
      %v2884 = vpack.c.bf16 %v2836, %v2835
      %v2885 = vpack.c.bf16 %v2838, %v2837
      %v2886 = vpack.c.bf16 %v2840, %v2839
      %v2887 = vpack.c.bf16 %v2842, %v2841
      %v2888 = vpack.c.bf16 %v2844, %v2843
      %v2889 = vpack.c.bf16 %v2846, %v2845
      %v2890 = vpack.c.bf16 %v2848, %v2847
      %v2891 = vpack.c.bf16 %v2850, %v2849
      %v2892 = vpack.c.bf16 %v2852, %v2851
      %v2893 = vpack.c.bf16 %v2854, %v2853
      %v2894 = vpack.c.bf16 %v2856, %v2855
      %v2895 = vpack.c.bf16 %v2858, %v2857
      %v2896 = vpack.c.bf16 %v2860, %v2859
      %v2897 = vpack.c.bf16 %v2862, %v2861
      %v2898 = vpack.c.bf16 %v2864, %v2863
      %v2899 = vpack.c.bf16 %v2866, %v2865
      %v2900 = vpack.c.bf16 %v2868, %v2867
      %v2933 = vunpack.c.l.b16 %v2869
      %v2934 = vunpack.c.h.b16 %v2869
      %v2935 = vunpack.c.l.b16 %v2870
      %v2936 = vunpack.c.h.b16 %v2870
      %v2937 = vunpack.c.l.b16 %v2871
      %v2938 = vunpack.c.h.b16 %v2871
      %v2939 = vunpack.c.l.b16 %v2872
      %v2940 = vunpack.c.h.b16 %v2872
      %v2941 = vunpack.c.l.b16 %v2873
      %v2942 = vunpack.c.h.b16 %v2873
      %v2943 = vunpack.c.l.b16 %v2874
      %v2944 = vunpack.c.h.b16 %v2874
      %v2945 = vunpack.c.l.b16 %v2875
      %v2946 = vunpack.c.h.b16 %v2875
      %v2947 = vunpack.c.l.b16 %v2876
      %v2948 = vunpack.c.h.b16 %v2876
      %v2949 = vunpack.c.l.b16 %v2877
      %v2950 = vunpack.c.h.b16 %v2877
      %v2951 = vunpack.c.l.b16 %v2878
      %v2952 = vunpack.c.h.b16 %v2878
      %v2953 = vunpack.c.l.b16 %v2879
      %v2954 = vunpack.c.h.b16 %v2879
      %v2955 = vunpack.c.l.b16 %v2880
      %v2956 = vunpack.c.h.b16 %v2880
      %v2957 = vunpack.c.l.b16 %v2881
      %v2958 = vunpack.c.h.b16 %v2881
      %v2959 = vunpack.c.l.b16 %v2882
      %v2960 = vunpack.c.h.b16 %v2882
      %v2961 = vunpack.c.l.b16 %v2883
      %v2962 = vunpack.c.h.b16 %v2883
      %v2963 = vunpack.c.l.b16 %v2884
      %v2964 = vunpack.c.h.b16 %v2884
      %v2965 = vunpack.c.l.b16 %v2885
      %v2966 = vunpack.c.h.b16 %v2885
      %v2967 = vunpack.c.l.b16 %v2886
      %v2968 = vunpack.c.h.b16 %v2886
      %v2969 = vunpack.c.l.b16 %v2887
      %v2970 = vunpack.c.h.b16 %v2887
      %v2971 = vunpack.c.l.b16 %v2888
      %v2972 = vunpack.c.h.b16 %v2888
      %v2973 = vunpack.c.l.b16 %v2889
      %v2974 = vunpack.c.h.b16 %v2889
      %v2975 = vunpack.c.l.b16 %v2890
      %v2976 = vunpack.c.h.b16 %v2890
      %v2977 = vunpack.c.l.b16 %v2891
      %v2978 = vunpack.c.h.b16 %v2891
      %v2979 = vunpack.c.l.b16 %v2892
      %v2980 = vunpack.c.h.b16 %v2892
      %v2981 = vunpack.c.l.b16 %v2893
      %v2982 = vunpack.c.h.b16 %v2893
      %v2983 = vunpack.c.l.b16 %v2894
      %v2984 = vunpack.c.h.b16 %v2894
      %v2985 = vunpack.c.l.b16 %v2895
      %v2986 = vunpack.c.h.b16 %v2895
      %v2987 = vunpack.c.l.b16 %v2896
      %v2988 = vunpack.c.h.b16 %v2896
      %v2989 = vunpack.c.l.b16 %v2897
      %v2990 = vunpack.c.h.b16 %v2897
      %v2991 = vunpack.c.l.b16 %v2898
      %v2992 = vunpack.c.h.b16 %v2898
      %v2993 = vunpack.c.l.b16 %v2899
      %v2994 = vunpack.c.h.b16 %v2899
      %v2995 = vunpack.c.l.b16 %v2900
      %v2996 = vunpack.c.h.b16 %v2900
      %v2997 = vpack.c.b16 %v2933, %v2933
      %v2998 = vpack.c.b16 %v2934, %v2934
      %v2999 = vpack.c.b16 %v2935, %v2935
      %v3000 = vpack.c.b16 %v2936, %v2936
      %v3001 = vpack.c.b16 %v2937, %v2937
      %v3002 = vpack.c.b16 %v2938, %v2938
      %v3003 = vpack.c.b16 %v2939, %v2939
      %v3004 = vpack.c.b16 %v2940, %v2940
      %v3005 = vpack.c.b16 %v2941, %v2941
      %v3006 = vpack.c.b16 %v2942, %v2942
      %v3007 = vpack.c.b16 %v2943, %v2943
      %v3008 = vpack.c.b16 %v2944, %v2944
      %v3009 = vpack.c.b16 %v2945, %v2945
      %v3010 = vpack.c.b16 %v2946, %v2946
      %v3011 = vpack.c.b16 %v2947, %v2947
      %v3012 = vpack.c.b16 %v2948, %v2948
      %v3013 = vpack.c.b16 %v2949, %v2949
      %v3014 = vpack.c.b16 %v2950, %v2950
      %v3015 = vpack.c.b16 %v2951, %v2951
      %v3016 = vpack.c.b16 %v2952, %v2952
      %v3017 = vpack.c.b16 %v2953, %v2953
      %v3018 = vpack.c.b16 %v2954, %v2954
      %v3019 = vpack.c.b16 %v2955, %v2955
      %v3020 = vpack.c.b16 %v2956, %v2956
      %v3021 = vpack.c.b16 %v2957, %v2957
      %v3022 = vpack.c.b16 %v2958, %v2958
      %v3023 = vpack.c.b16 %v2959, %v2959
      %v3024 = vpack.c.b16 %v2960, %v2960
      %v3025 = vpack.c.b16 %v2961, %v2961
      %v3026 = vpack.c.b16 %v2962, %v2962
      %v3027 = vpack.c.b16 %v2963, %v2963
      %v3028 = vpack.c.b16 %v2964, %v2964
      %v3029 = vpack.c.b16 %v2965, %v2965
      %v3030 = vpack.c.b16 %v2966, %v2966
      %v3031 = vpack.c.b16 %v2967, %v2967
      %v3032 = vpack.c.b16 %v2968, %v2968
      %v3033 = vpack.c.b16 %v2969, %v2969
      %v3034 = vpack.c.b16 %v2970, %v2970
      %v3035 = vpack.c.b16 %v2971, %v2971
      %v3036 = vpack.c.b16 %v2972, %v2972
      %v3037 = vpack.c.b16 %v2973, %v2973
      %v3038 = vpack.c.b16 %v2974, %v2974
      %v3039 = vpack.c.b16 %v2975, %v2975
      %v3040 = vpack.c.b16 %v2976, %v2976
      %v3041 = vpack.c.b16 %v2977, %v2977
      %v3042 = vpack.c.b16 %v2978, %v2978
      %v3043 = vpack.c.b16 %v2979, %v2979
      %v3044 = vpack.c.b16 %v2980, %v2980
      %v3045 = vpack.c.b16 %v2981, %v2981
      %v3046 = vpack.c.b16 %v2982, %v2982
      %v3047 = vpack.c.b16 %v2983, %v2983
      %v3048 = vpack.c.b16 %v2984, %v2984
      %v3049 = vpack.c.b16 %v2985, %v2985
      %v3050 = vpack.c.b16 %v2986, %v2986
      %v3051 = vpack.c.b16 %v2987, %v2987
      %v3052 = vpack.c.b16 %v2988, %v2988
      %v3053 = vpack.c.b16 %v2989, %v2989
      %v3054 = vpack.c.b16 %v2990, %v2990
      %v3055 = vpack.c.b16 %v2991, %v2991
      %v3056 = vpack.c.b16 %v2992, %v2992
      %v3057 = vpack.c.b16 %v2993, %v2993
      %v3058 = vpack.c.b16 %v2994, %v2994
      %v3059 = vpack.c.b16 %v2995, %v2995
      %v3060 = vpack.c.b16 %v2996, %v2996
      %vm3125 = vcmask 125952
      %3126 = vst.msk [vmem:[%s202] sm:$0xf] %vm3125, %v2997
      %3127 = vst.msk [vmem:[%s202 + $0x4] sm:$0xf] %vm3125, %v2998
      %3128 = vst.msk [vmem:[%s202 + $0x8] sm:$0xf] %vm3125, %v2999
      %3129 = vst.msk [vmem:[%s202 + $0xc] sm:$0xf] %vm3125, %v3000
      %3130 = vst.msk [vmem:[%s202 + $0x10] sm:$0xf] %vm3125, %v3001
      %3131 = vst.msk [vmem:[%s202 + $0x14] sm:$0xf] %vm3125, %v3002
      %3132 = vst.msk [vmem:[%s202 + $0x18] sm:$0xf] %vm3125, %v3003
      %3133 = vst.msk [vmem:[%s202 + $0x1c] sm:$0xf] %vm3125, %v3004
      %3134 = vst.msk [vmem:[%s202 + $0x20] sm:$0xf] %vm3125, %v3005
      %3135 = vst.msk [vmem:[%s202 + $0x24] sm:$0xf] %vm3125, %v3006
      %3136 = vst.msk [vmem:[%s202 + $0x28] sm:$0xf] %vm3125, %v3007
      %3137 = vst.msk [vmem:[%s202 + $0x2c] sm:$0xf] %vm3125, %v3008
      %3138 = vst.msk [vmem:[%s202 + $0x30] sm:$0xf] %vm3125, %v3009
      %3139 = vst.msk [vmem:[%s202 + $0x34] sm:$0xf] %vm3125, %v3010
      %3140 = vst.msk [vmem:[%s202 + $0x38] sm:$0xf] %vm3125, %v3011
      %3141 = vst.msk [vmem:[%s202 + $0x3c] sm:$0xf] %vm3125, %v3012
      %3142 = vst.msk [vmem:[%s202 + $0x40] sm:$0xf] %vm3125, %v3013
      %3143 = vst.msk [vmem:[%s202 + $0x44] sm:$0xf] %vm3125, %v3014
      %3144 = vst.msk [vmem:[%s202 + $0x48] sm:$0xf] %vm3125, %v3015
      %3145 = vst.msk [vmem:[%s202 + $0x4c] sm:$0xf] %vm3125, %v3016
      %3146 = vst.msk [vmem:[%s202 + $0x50] sm:$0xf] %vm3125, %v3017
      %3147 = vst.msk [vmem:[%s202 + $0x54] sm:$0xf] %vm3125, %v3018
      %3148 = vst.msk [vmem:[%s202 + $0x58] sm:$0xf] %vm3125, %v3019
      %3149 = vst.msk [vmem:[%s202 + $0x5c] sm:$0xf] %vm3125, %v3020
      %3150 = vst.msk [vmem:[%s202 + $0x60] sm:$0xf] %vm3125, %v3021
      %3151 = vst.msk [vmem:[%s202 + $0x64] sm:$0xf] %vm3125, %v3022
      %3152 = vst.msk [vmem:[%s202 + $0x68] sm:$0xf] %vm3125, %v3023
      %3153 = vst.msk [vmem:[%s202 + $0x6c] sm:$0xf] %vm3125, %v3024
      %3154 = vst.msk [vmem:[%s202 + $0x70] sm:$0xf] %vm3125, %v3025
      %3155 = vst.msk [vmem:[%s202 + $0x74] sm:$0xf] %vm3125, %v3026
      %3156 = vst.msk [vmem:[%s202 + $0x78] sm:$0xf] %vm3125, %v3027
      %3157 = vst.msk [vmem:[%s202 + $0x7c] sm:$0xf] %vm3125, %v3028
      %3158 = vst.msk [vmem:[%s202 + $0x80] sm:$0xf] %vm3125, %v3029
      %3159 = vst.msk [vmem:[%s202 + $0x84] sm:$0xf] %vm3125, %v3030
      %3160 = vst.msk [vmem:[%s202 + $0x88] sm:$0xf] %vm3125, %v3031
      %3161 = vst.msk [vmem:[%s202 + $0x8c] sm:$0xf] %vm3125, %v3032
      %3162 = vst.msk [vmem:[%s202 + $0x90] sm:$0xf] %vm3125, %v3033
      %3163 = vst.msk [vmem:[%s202 + $0x94] sm:$0xf] %vm3125, %v3034
      %3164 = vst.msk [vmem:[%s202 + $0x98] sm:$0xf] %vm3125, %v3035
      %3165 = vst.msk [vmem:[%s202 + $0x9c] sm:$0xf] %vm3125, %v3036
      %3166 = vst.msk [vmem:[%s202 + $0xa0] sm:$0xf] %vm3125, %v3037
      %3167 = vst.msk [vmem:[%s202 + $0xa4] sm:$0xf] %vm3125, %v3038
      %3168 = vst.msk [vmem:[%s202 + $0xa8] sm:$0xf] %vm3125, %v3039
      %3169 = vst.msk [vmem:[%s202 + $0xac] sm:$0xf] %vm3125, %v3040
      %3170 = vst.msk [vmem:[%s202 + $0xb0] sm:$0xf] %vm3125, %v3041
      %3171 = vst.msk [vmem:[%s202 + $0xb4] sm:$0xf] %vm3125, %v3042
      %3172 = vst.msk [vmem:[%s202 + $0xb8] sm:$0xf] %vm3125, %v3043
      %3173 = vst.msk [vmem:[%s202 + $0xbc] sm:$0xf] %vm3125, %v3044
      %3174 = vst.msk [vmem:[%s202 + $0xc0] sm:$0xf] %vm3125, %v3045
      %3175 = vst.msk [vmem:[%s202 + $0xc4] sm:$0xf] %vm3125, %v3046
      %3176 = vst.msk [vmem:[%s202 + $0xc8] sm:$0xf] %vm3125, %v3047
      %3177 = vst.msk [vmem:[%s202 + $0xcc] sm:$0xf] %vm3125, %v3048
      %3178 = vst.msk [vmem:[%s202 + $0xd0] sm:$0xf] %vm3125, %v3049
      %3179 = vst.msk [vmem:[%s202 + $0xd4] sm:$0xf] %vm3125, %v3050
      %3180 = vst.msk [vmem:[%s202 + $0xd8] sm:$0xf] %vm3125, %v3051
      %3181 = vst.msk [vmem:[%s202 + $0xdc] sm:$0xf] %vm3125, %v3052
      %3182 = vst.msk [vmem:[%s202 + $0xe0] sm:$0xf] %vm3125, %v3053
      %3183 = vst.msk [vmem:[%s202 + $0xe4] sm:$0xf] %vm3125, %v3054
      %3184 = vst.msk [vmem:[%s202 + $0xe8] sm:$0xf] %vm3125, %v3055
      %3185 = vst.msk [vmem:[%s202 + $0xec] sm:$0xf] %vm3125, %v3056
      %3186 = vst.msk [vmem:[%s202 + $0xf0] sm:$0xf] %vm3125, %v3057
      %3187 = vst.msk [vmem:[%s202 + $0xf4] sm:$0xf] %vm3125, %v3058
      %3188 = vst.msk [vmem:[%s202 + $0xf8] sm:$0xf] %vm3125, %v3059
      %3189 = vst.msk [vmem:[%s202 + $0xfc] sm:$0xf] %vm3125, %v3060
      %s3190 = smul.u32 64, %s15
      %p3191 = scmp.lt.s32.totalorder %s3190, 255
      %s3192 = scalar_select %p3191, %s3190, 255
      %s3193 = smul.addr %s3192, 4
      %s3194 = scalar_lea.vmem %s4, %s3193
      // Predicated region
      $region37: #{tpu_custom_call.1} parent=35 // pred_check
        %p3195 = pneg %p122
      $region38: #{tpu_custom_call.1} parent=35 // pred_check_branch
        %3197 = sbr.rel (%p3195) target = $region40
      $region39: #{tpu_custom_call.1} parent=35 // pred_region
        %s3198 = smul.u32 64, %s15
      $region40: #{tpu_custom_call.1} parent=35 // pred_fallthru
        _
    $region36: #{tpu_custom_call.1} parent=5 // pred_fallthru
      _
    %p3199 = scmp.le.s32.totalorder 2, %s10
    // Predicated region
    $region41: #{tpu_custom_call.1} parent=5 // pred_check
      %p3200 = pneg %p3199
    $region42: #{tpu_custom_call.1} parent=5 // pred_check_branch
      %3202 = sbr.rel (%p3200) target = $region44
    $region43: #{tpu_custom_call.1} parent=5 // pred_region
      %s3203 = ssub.s32 %s10, 2
      // Predicated region
      $region45: #{tpu_custom_call.1} parent=43 // pred_check
        %p3204 = pneg %p128
      $region46: #{tpu_custom_call.1} parent=43 // pred_check_branch
        %3206 = sbr.rel (%p3204) target = $region48
      $region47: #{tpu_custom_call.1} parent=43 // pred_region
        %s3207 = smul.u32 64, %s16
        %p3208 = scmp.lt.s32.totalorder %s3207, 255
        %s3209 = scalar_select %p3208, %s3207, 255
        %s3210 = smul.addr %s3209, 4
        %s3211 = scalar_lea.vmem %s4, %s3210
      $region48: #{tpu_custom_call.1} parent=43 // pred_fallthru
        _
    $region44: #{tpu_custom_call.1} parent=5 // pred_fallthru
      _
  $region6: #{tpu_custom_call.1} parent=0 // loop_footer
    %s14 = sadd.s32 1, %s10
  $region7: #{tpu_custom_call.1} parent=0 // loop_footer_branch
    %9 = sbr.rel target = $region3
  $region8: #{tpu_custom_call.1} parent=0 // loop_exit
    _

</llo_original>
